<compile_context>
chip_gen: v6e
topology: v6e:2x2x1
jax: 0.10.0
libtpu: 0.0.40
codegen_flags: <defaults>
</compile_context>

<pallas_src>
import jax
import jax.numpy as jnp
from jax.experimental import pallas as pl
from jax.experimental.pallas import tpu as pltpu


def _discriminator_kernel(x_ref, w1_ref, b1_ref, w2_ref, b2_ref, w3_ref, b3_ref,
                          out_ref, h1_acc):
    """Grid = (batch tiles, K tiles). Layer-1 accumulates over K; the rest of
    the MLP runs only on the last K step."""
    k = pl.program_id(1)
    nk = pl.num_programs(1)

    @pl.when(k == 0)
    def _init():
        h1_acc[...] = jnp.zeros_like(h1_acc)

    # Layer 1 partial contraction for this K tile (bf16 MXU, f32 accumulate).
    h1_acc[...] += jnp.dot(x_ref[...], w1_ref[...],
                           preferred_element_type=jnp.float32)

    @pl.when(k == nk - 1)
    def _finish():
        h1 = h1_acc[...] + b1_ref[...]
        h1 = jnp.where(h1 > 0, h1, 0.2 * h1)                   # LeakyReLU(0.2)

        h2 = jnp.dot(h1.astype(jnp.bfloat16), w2_ref[...],
                     preferred_element_type=jnp.float32) + b2_ref[...]
        h2 = jnp.where(h2 > 0, h2, 0.2 * h2)                   # LeakyReLU(0.2)

        # 256 -> 1 head on VPU/XLU: multiply by the weight row, reduce lanes.
        logits = jnp.sum(h2 * w3_ref[...], axis=-1, keepdims=True) + b3_ref[0, 0]
        # Sigmoid: exp + reciprocal both live in the (otherwise idle) EUP slot.
        out_ref[...] = pl.reciprocal(1.0 + jnp.exp(-logits), approx=True)


def _round_up(n, m):
    return (n + m - 1) // m * m


def _vmem_limit_bytes(default=48 << 20):
    """Generation-aware VMEM budget (v7x only has 64 MiB physical per TC)."""
    try:
        cap = getattr(pltpu.get_tpu_info(), "vmem_capacity_bytes", None)
        if cap:
            return int(min(default, (cap * 3) // 4))
    except Exception:
        pass
    return default


@jax.jit
def discriminator_forward(img, params):
    """img: (B, C, H, W) float32. Returns (B, 1) validity in [0, 1]."""
    w1, b1, w2, b2, w3, b3 = params
    B = img.shape[0]
    D = w1.shape[0]
    x = img.reshape(B, -1)                                     # NCHW flatten
    assert x.shape[1] == D, "flattened image dim must match w1 fan-in"

    # ---- tiling / padding (static at trace time) -------------------------
    TM = min(128, _round_up(B, 16))          # batch tile, bf16 sublane-aligned
    B_pad = _round_up(B, TM)
    D_pad = _round_up(D, 128)                # K tiles must be 128-aligned
    TK = 512 if D_pad % 512 == 0 else (256 if D_pad % 256 == 0 else 128)

    # bf16 MXU operands (f32 accumulation in-kernel). Zero-pad batch + K.
    x_p = jnp.zeros((B_pad, D_pad), jnp.bfloat16).at[:B, :D].set(
        x.astype(jnp.bfloat16))
    w1_p = jnp.zeros((D_pad, 512), jnp.bfloat16).at[:D, :].set(
        w1.astype(jnp.bfloat16))
    w2_b = w2.astype(jnp.bfloat16)
    w3_row = w3.reshape(1, 256).astype(jnp.float32)            # head as a row

    grid = (B_pad // TM, D_pad // TK)        # reduction (K) axis last

    out = pl.pallas_call(
        _discriminator_kernel,
        out_shape=jax.ShapeDtypeStruct((B_pad, 1), jnp.float32),
        grid_spec=pltpu.PrefetchScalarGridSpec(
            num_scalar_prefetch=0,
            grid=grid,
            in_specs=[
                pl.BlockSpec((TM, TK), lambda i, k: (i, k)),        # x tile
                pl.BlockSpec((TK, 512), lambda i, k: (k, 0)),       # w1 K-tile
                pl.BlockSpec((1, 512), lambda i, k: (0, 0)),        # b1 (resident)
                pl.BlockSpec((512, 256), lambda i, k: (0, 0)),      # w2 (resident)
                pl.BlockSpec((1, 256), lambda i, k: (0, 0)),        # b2 (resident)
                pl.BlockSpec((1, 256), lambda i, k: (0, 0)),        # w3 row (resident)
                pl.BlockSpec(memory_space=pltpu.MemorySpace.SMEM),  # b3 scalar
            ],
            out_specs=pl.BlockSpec((TM, 1), lambda i, k: (i, 0)),
            scratch_shapes=[pltpu.VMEM((TM, 512), jnp.float32)],    # h1 accumulator
        ),
        compiler_params=pltpu.CompilerParams(
            dimension_semantics=("parallel", "arbitrary"),
            vmem_limit_bytes=_vmem_limit_bytes(),
        ),
    )(x_p, w1_p, b1, w2_b, b2, w3_row, b3)

    return out[:B]


def init_params(key, in_dim):
    """Deterministic init mimicking torch.nn.Linear default (U[-1/sqrt(fan_in), ...])."""
    dims = [(in_dim, 512), (512, 256), (256, 1)]
    params = []
    for (fan_in, fan_out) in dims:
        key, kw, kb = jax.random.split(key, 3)
        bound = 1.0 / jnp.sqrt(fan_in)
        w = jax.random.uniform(kw, (fan_in, fan_out), jnp.float32, -bound, bound)
        b = jax.random.uniform(kb, (1, fan_out), jnp.float32, -bound, bound)
        params += [w, b]
    return tuple(params)


if __name__ == "__main__":
    # Small shapes consistent with the module: img_shape = (C, H, W)
    B, C, H, W = 2, 4, 16, 16
    in_dim = C * H * W  # 1024

    key = jax.random.PRNGKey(0)
    k_img, k_par = jax.random.split(key)
    img = jax.random.normal(k_img, (B, C, H, W), dtype=jnp.float32)
    params = init_params(k_par, in_dim)

    out = discriminator_forward(img, params)
    out = jax.block_until_ready(out)

    # Plain-JAX reference with the same bf16 matmul operands / f32 accumulation.
    x = img.reshape(B, -1)
    w1, b1, w2, b2, w3, b3 = params
    h1 = jnp.dot(x.astype(jnp.bfloat16), w1.astype(jnp.bfloat16),
                 preferred_element_type=jnp.float32) + b1
    h1 = jnp.where(h1 > 0, h1, 0.2 * h1)
    h2 = jnp.dot(h1.astype(jnp.bfloat16), w2.astype(jnp.bfloat16),
                 preferred_element_type=jnp.float32) + b2
    h2 = jnp.where(h2 > 0, h2, 0.2 * h2)
    ref = jax.nn.sigmoid(h2 @ w3 + b3)

    assert out.shape == (B, 1)
    assert jnp.allclose(out, ref, atol=2e-3, rtol=2e-3)

    print("KERNEL_OK")
</pallas_src>

<mosaic_0001>
module attributes {stable_mosaic.version = 11 : i64} {
  func.func @_discriminator_kernel(%arg0: i32, %arg1: i32, %arg2: memref<16x512xbf16, #tpu.memory_space<vmem>>, %arg3: memref<512x512xbf16, #tpu.memory_space<vmem>>, %arg4: memref<1x512xf32, #tpu.memory_space<vmem>>, %arg5: memref<512x256xbf16, #tpu.memory_space<vmem>>, %arg6: memref<1x256xf32, #tpu.memory_space<vmem>>, %arg7: memref<1x256xf32, #tpu.memory_space<vmem>>, %arg8: memref<1x1xf32, #tpu.memory_space<smem>>, %arg9: memref<16x1xf32, #tpu.memory_space<vmem>>, %arg10: memref<16x512xf32, #tpu.memory_space<vmem>>) attributes {dimension_semantics = [#tpu.dimension_semantics<parallel>, #tpu.dimension_semantics<arbitrary>], iteration_bounds = array<i64: 1, 2>, scalar_prefetch = 0 : i64, scratch_operands = 1 : i64, tpu.core_type = #tpu.core_type<tc>, window_params = [{transform_indices = @transform_0, window_bounds = array<i64: 16, 512>}, {transform_indices = @transform_1, window_bounds = array<i64: 512, 512>}, {pipeline_mode = #tpu.pipeline_mode<synchronous>, transform_indices = @transform_2, window_bounds = array<i64: 1, 512>}, {pipeline_mode = #tpu.pipeline_mode<synchronous>, transform_indices = @transform_3, window_bounds = array<i64: 512, 256>}, {pipeline_mode = #tpu.pipeline_mode<synchronous>, transform_indices = @transform_4, window_bounds = array<i64: 1, 256>}, {pipeline_mode = #tpu.pipeline_mode<synchronous>, transform_indices = @transform_5, window_bounds = array<i64: 1, 256>}, {transform_indices = @transform_6, window_bounds = array<i64: 1, 1>}, {transform_indices = @transform_7, window_bounds = array<i64: 16, 1>}]} {
    %c0_i32 = arith.constant 0 : i32
    %0 = arith.cmpi eq, %arg1, %c0_i32 : i32
    %1 = arith.extui %0 : i1 to i32
    %c0_i32_0 = arith.constant 0 : i32
    %2 = arith.cmpi ne, %1, %c0_i32_0 : i32
    scf.if %2 {
      %cst_9 = arith.constant 0.000000e+00 : f32
      %12 = vector.broadcast %cst_9 : f32 to vector<16x512xf32>
      %c0_10 = arith.constant 0 : index
      %c0_11 = arith.constant 0 : index
      %13 = vector.load %arg10[%c0_10, %c0_11] : memref<16x512xf32, #tpu.memory_space<vmem>>, vector<16x512xf32>
      tpu.vector_store %arg10[%c0_10, %c0_11], %12 {strides = array<i32>} : memref<16x512xf32, #tpu.memory_space<vmem>>, vector<16x512xf32>,
    } else {
    }
    %c0 = arith.constant 0 : index
    %c0_1 = arith.constant 0 : index
    %3 = vector.load %arg10[%c0, %c0_1] : memref<16x512xf32, #tpu.memory_space<vmem>>, vector<16x512xf32>
    %c0_2 = arith.constant 0 : index
    %c0_3 = arith.constant 0 : index
    %4 = vector.load %arg2[%c0_2, %c0_3] : memref<16x512xbf16, #tpu.memory_space<vmem>>, vector<16x512xbf16>
    %c0_4 = arith.constant 0 : index
    %c0_5 = arith.constant 0 : index
    %5 = vector.load %arg3[%c0_4, %c0_5] : memref<512x512xbf16, #tpu.memory_space<vmem>>, vector<512x512xbf16>
    %cst = arith.constant dense<0.000000e+00> : vector<16x512xf32>
    %6 = tpu.matmul %4, %5, %cst {dimension_numbers = #tpu.dot_dimension_numbers<[1], [0], [0], [1], [0, 0, 1, 1], [], []>} : vector<16x512xbf16>, vector<512x512xbf16>, vector<16x512xf32> -> vector<16x512xf32>
    %7 = arith.addf %3, %6 : vector<16x512xf32>
    %c0_6 = arith.constant 0 : index
    %c0_7 = arith.constant 0 : index
    %8 = vector.load %arg10[%c0_6, %c0_7] : memref<16x512xf32, #tpu.memory_space<vmem>>, vector<16x512xf32>
    tpu.vector_store %arg10[%c0_6, %c0_7], %7 {strides = array<i32>} : memref<16x512xf32, #tpu.memory_space<vmem>>, vector<16x512xf32>,
    %c1_i32 = arith.constant 1 : i32
    %9 = arith.cmpi eq, %arg1, %c1_i32 : i32
    %10 = arith.extui %9 : i1 to i32
    %c0_i32_8 = arith.constant 0 : i32
    %11 = arith.cmpi ne, %10, %c0_i32_8 : i32
    scf.if %11 {
      %c0_9 = arith.constant 0 : index
      %c0_10 = arith.constant 0 : index
      %12 = vector.load %arg10[%c0_9, %c0_10] : memref<16x512xf32, #tpu.memory_space<vmem>>, vector<16x512xf32>
      %c0_11 = arith.constant 0 : index
      %c0_12 = arith.constant 0 : index
      %13 = vector.load %arg4[%c0_11, %c0_12] : memref<1x512xf32, #tpu.memory_space<vmem>>, vector<1x512xf32>
      %14 = vector.broadcast %13 : vector<1x512xf32> to vector<16x512xf32>
      %15 = arith.addf %12, %14 : vector<16x512xf32>
      %cst_13 = arith.constant 0.000000e+00 : f32
      %16 = vector.broadcast %cst_13 : f32 to vector<16x512xf32>
      %17 = arith.cmpf ogt, %15, %16 : vector<16x512xf32>
      %cst_14 = arith.constant 2.000000e-01 : f32
      %18 = vector.broadcast %cst_14 : f32 to vector<16x512xf32>
      %19 = arith.mulf %18, %15 : vector<16x512xf32>
      %20 = arith.select %17, %15, %19 : vector<16x512xi1>, vector<16x512xf32>
      %21 = arith.truncf %20 : vector<16x512xf32> to vector<16x512xbf16>
      %c0_15 = arith.constant 0 : index
      %c0_16 = arith.constant 0 : index
      %22 = vector.load %arg5[%c0_15, %c0_16] : memref<512x256xbf16, #tpu.memory_space<vmem>>, vector<512x256xbf16>
      %cst_17 = arith.constant dense<0.000000e+00> : vector<16x256xf32>
      %23 = tpu.matmul %21, %22, %cst_17 {dimension_numbers = #tpu.dot_dimension_numbers<[1], [0], [0], [1], [0, 0, 1, 1], [], []>} : vector<16x512xbf16>, vector<512x256xbf16>, vector<16x256xf32> -> vector<16x256xf32>
      %c0_18 = arith.constant 0 : index
      %c0_19 = arith.constant 0 : index
      %24 = vector.load %arg6[%c0_18, %c0_19] : memref<1x256xf32, #tpu.memory_space<vmem>>, vector<1x256xf32>
      %25 = vector.broadcast %24 : vector<1x256xf32> to vector<16x256xf32>
      %26 = arith.addf %23, %25 : vector<16x256xf32>
      %cst_20 = arith.constant 0.000000e+00 : f32
      %27 = vector.broadcast %cst_20 : f32 to vector<16x256xf32>
      %28 = arith.cmpf ogt, %26, %27 : vector<16x256xf32>
      %cst_21 = arith.constant 2.000000e-01 : f32
      %29 = vector.broadcast %cst_21 : f32 to vector<16x256xf32>
      %30 = arith.mulf %29, %26 : vector<16x256xf32>
      %31 = arith.select %28, %26, %30 : vector<16x256xi1>, vector<16x256xf32>
      %c0_22 = arith.constant 0 : index
      %c0_23 = arith.constant 0 : index
      %32 = vector.load %arg7[%c0_22, %c0_23] : memref<1x256xf32, #tpu.memory_space<vmem>>, vector<1x256xf32>
      %33 = vector.broadcast %32 : vector<1x256xf32> to vector<16x256xf32>
      %34 = arith.mulf %31, %33 : vector<16x256xf32>
      %cst_24 = arith.constant dense<0.000000e+00> : vector<16xf32>
      %35 = vector.multi_reduction <add>, %34, %cst_24 [1] : vector<16x256xf32> to vector<16xf32>
      %36 = vector.shape_cast %35 : vector<16xf32> to vector<16x1xf32>
      %c0_25 = arith.constant 0 : index
      %c0_26 = arith.constant 0 : index
      %37 = memref.load %arg8[%c0_25, %c0_26] : memref<1x1xf32, #tpu.memory_space<smem>>
      %38 = vector.broadcast %37 : f32 to vector<16x1xf32>
      %39 = arith.addf %36, %38 : vector<16x1xf32>
      %cst_27 = arith.constant 0.000000e+00 : f32
      %40 = vector.broadcast %cst_27 : f32 to vector<16x1xf32>
      %41 = arith.subf %40, %39 : vector<16x1xf32>
      %42 = math.exp %41 : vector<16x1xf32>
      %cst_28 = arith.constant 1.000000e+00 : f32
      %43 = vector.broadcast %cst_28 : f32 to vector<16x1xf32>
      %44 = arith.addf %43, %42 : vector<16x1xf32>
      %45 = tpu.reciprocal %44 {approx = true} : vector<16x1xf32> -> vector<16x1xf32>
      %c0_29 = arith.constant 0 : index
      %c0_30 = arith.constant 0 : index
      %46 = vector.load %arg9[%c0_29, %c0_30] : memref<16x1xf32, #tpu.memory_space<vmem>>, vector<16x1xf32>
      tpu.vector_store %arg9[%c0_29, %c0_30], %45 {strides = array<i32>} : memref<16x1xf32, #tpu.memory_space<vmem>>, vector<16x1xf32>,
    } else {
    }
    return
  }
  func.func @transform_0(%arg0: i32, %arg1: i32) -> (i32, i32) {
    %c0_i32 = arith.constant 0 : i32
    return %arg0, %arg1 : i32, i32
  }
  func.func @transform_1(%arg0: i32, %arg1: i32) -> (i32, i32) {
    %c0_i32 = arith.constant 0 : i32
    %c0_i32_0 = arith.constant 0 : i32
    return %arg1, %c0_i32 : i32, i32
  }
  func.func @transform_2(%arg0: i32, %arg1: i32) -> (i32, i32) {
    %c0_i32 = arith.constant 0 : i32
    %c0_i32_0 = arith.constant 0 : i32
    %c0_i32_1 = arith.constant 0 : i32
    return %c0_i32, %c0_i32_0 : i32, i32
  }
  func.func @transform_3(%arg0: i32, %arg1: i32) -> (i32, i32) {
    %c0_i32 = arith.constant 0 : i32
    %c0_i32_0 = arith.constant 0 : i32
    %c0_i32_1 = arith.constant 0 : i32
    return %c0_i32, %c0_i32_0 : i32, i32
  }
  func.func @transform_4(%arg0: i32, %arg1: i32) -> (i32, i32) {
    %c0_i32 = arith.constant 0 : i32
    %c0_i32_0 = arith.constant 0 : i32
    %c0_i32_1 = arith.constant 0 : i32
    return %c0_i32, %c0_i32_0 : i32, i32
  }
  func.func @transform_5(%arg0: i32, %arg1: i32) -> (i32, i32) {
    %c0_i32 = arith.constant 0 : i32
    %c0_i32_0 = arith.constant 0 : i32
    %c0_i32_1 = arith.constant 0 : i32
    return %c0_i32, %c0_i32_0 : i32, i32
  }
  func.func @transform_6(%arg0: i32, %arg1: i32) -> (i32, i32) {
    %c0_i32 = arith.constant 0 : i32
    %c0_i32_0 = arith.constant 0 : i32
    %c0_i32_1 = arith.constant 0 : i32
    return %c0_i32, %c0_i32_0 : i32, i32
  }
  func.func @transform_7(%arg0: i32, %arg1: i32) -> (i32, i32) {
    %c0_i32 = arith.constant 0 : i32
    %c0_i32_0 = arith.constant 0 : i32
    return %arg0, %c0_i32 : i32, i32
  }
}

</mosaic_0001>

<llo_original>
// kernel: discriminator_forward.1
$region0: #{discriminator_forward.1}
  #allocation0 [shape = 'u32[]', space=smem, size = 0x4, offset = 0x4, fixed_abs, tag = 'smem constant byte address 0x4 - core index']
  #allocation1 [shape = 'u32[144,128]{1,0:T(1,128)}', space=vmem, size = 0x12000, scoped, tag = 'internal scratch']
  #allocation2 [shape = 'f32[16,512]{1,0:T(8,128)}', space=vmem, size = 0x8000, scoped, tag = 'scratch operand']
  #allocation3 [shape = 'f32[1,1]{1,0:T(1,128)S(6)}', space=smem, size = 0x200, scoped, tag = 'scoped memory for discriminator_forward.1']
  %s0 = inlined_call_operand.vmem [shape: bf16[16,1024], index: 0, kind: input, shape index: {}]
  %s1 = inlined_call_operand.vmem [shape: bf16[1024,512], index: 1, kind: input, shape index: {}]
  %s2 = inlined_call_operand.vmem [shape: f32[1,512], index: 2, kind: input, shape index: {}]
  %s3 = inlined_call_operand.vmem [shape: bf16[512,256], index: 3, kind: input, shape index: {}]
  %s4 = inlined_call_operand.vmem [shape: f32[1,256], index: 4, kind: input, shape index: {}]
  %s5 = inlined_call_operand.vmem [shape: f32[1,256], index: 5, kind: input, shape index: {}]
  %s6 = inlined_call_operand.<no memory space> [shape: f32[1,1], index: 6, kind: input, shape index: {}]
  %s7 = inlined_call_operand.vmem [shape: f32[16,1], index: 7, kind: output, shape index: {}]
  %s8 = sld [smem:[#allocation0]]
  $region92: #{discriminator_forward.1} parent=0
    _
  %s10 = ssub.s32 1, %s8
  %s11 = scalar_select 0, %s10, %s8
  %12 = sst [smem:[#allocation3]] %s6
  $region1: #{discriminator_forward.1} parent=0
    #allocation4 [shape = 'u8[32768]{0}', space=vmem, size = 0x8000, scoped, tag = 'input window, operand 0']
    loop: start=0, step=1, limit=4
    $region2: #{discriminator_forward.1} parent=1 // loop_pre_header
      _
    $region3: #{discriminator_forward.1} parent=1 // loop_header
      %s14 = sphi 0, %s18
      %p15 = scmp.ge.s32.totalorder %s14, 4
      %s21 = sphi 0, %s33
      %s22 = sphi 0, %s29
      %s23 = sphi 0, %s21
      %s24 = sphi 0, %s22
      %s25 = sphi 0, %s23
      %s26 = sphi 0, %s24
      %s38 = sphi 0, %s40
      %s41 = sphi 0, %s38
      %s42 = sphi 0, %s41
      %s58 = sphi 0, %s42
      %s64 = sphi 0, %s66
      %s67 = sphi 0, %s64
      %s68 = sphi 0, %s67
      %s84 = sphi 0, %s68
      %s88 = sphi 0, %s88
      %s90 = sphi 0, %s88
      %s91 = sphi 0, %s90
      %s105 = sphi 0, %s91
      %s109 = sphi 0, %s109
      %s111 = sphi 0, %s109
      %s112 = sphi 0, %s111
      %s126 = sphi 0, %s112
      %s130 = sphi 0, %s130
      %s132 = sphi 0, %s130
      %s133 = sphi 0, %s132
      %s147 = sphi 0, %s133
      %s151 = sphi 0, %s151
      %s153 = sphi 0, %s151
      %s154 = sphi 0, %s153
      %s168 = sphi 0, %s154
      %s172 = sphi 0, %s172
      %s174 = sphi 0, %s172
      %s175 = sphi 0, %s174
      %s189 = sphi 0, %s175
      %s195 = sphi 0, %s197
      %s198 = sphi 0, %s195
      %s199 = sphi 0, %s198
      %s215 = sphi 0, %s199
    $region4: #{discriminator_forward.1} parent=1 // loop_header_branch
      %17 = sbr.rel (%p15) target = $region8
    $region5: #{discriminator_forward.1} parent=1 // loop_body
      %s19 = ssub.s32 %s14, 1
      %s20 = ssub.s32 %s14, 2
      %s27 = sadd.s32 1, %s22
      %p28 = scmp.ge.s32.totalorder %s27, 2
      %s29 = scalar_select %p28, 0, %s27
      %s30 = sadd.s32 1, %s21
      %s31 = scalar_select %p28, %s30, %s21
      %p32 = scmp.ge.s32.totalorder %s31, 1
      %s33 = scalar_select %p32, 0, %s31
      %s34 = ssub.s32 %s21, %s33
      %s35 = ssub.s32 %s22, %s29
      %s36 = sor.u32 %s34, %s35
      %p37 = scmp.eq.s32.totalorder %s36, 0
      %s39 = sadd.s32 %s38, 1
      %s40 = scalar_select %p37, %s38, %s39
      %p43 = pneg %p37
      %p44 = scmp.eq.s32.totalorder %s14, 1
      %p45 = por %p43, %p44
      %p46 = scmp.ne.s32.totalorder %s38, %s41
      %p47 = scmp.eq.s32.totalorder %s14, 0
      %p48 = por %p46, %p47
      %p49 = scmp.ne.s32.totalorder %s38, %s41
      %p50 = scmp.eq.s32.totalorder %s19, 1
      %p51 = por %p49, %p50
      %p52 = scmp.ne.s32.totalorder %s41, %s42
      %p53 = scmp.eq.s32.totalorder %s19, 0
      %p54 = por %p52, %p53
      %p55 = scmp.ne.s32.totalorder %s41, %s42
      %p56 = scmp.eq.s32.totalorder %s20, 1
      %p57 = por %p55, %p56
      %p59 = scmp.ne.s32.totalorder %s42, %s58
      %p60 = scmp.eq.s32.totalorder %s20, 0
      %p61 = por %p59, %p60
      %s62 = ssub.s32 %s22, %s29
      %p63 = scmp.eq.s32.totalorder %s62, 0
      %s65 = sadd.s32 %s64, 1
      %s66 = scalar_select %p63, %s64, %s65
      %p69 = pneg %p63
      %p70 = scmp.eq.s32.totalorder %s14, 1
      %p71 = por %p69, %p70
      %p72 = scmp.ne.s32.totalorder %s64, %s67
      %p73 = scmp.eq.s32.totalorder %s14, 0
      %p74 = por %p72, %p73
      %p75 = scmp.ne.s32.totalorder %s64, %s67
      %p76 = scmp.eq.s32.totalorder %s19, 1
      %p77 = por %p75, %p76
      %p78 = scmp.ne.s32.totalorder %s67, %s68
      %p79 = scmp.eq.s32.totalorder %s19, 0
      %p80 = por %p78, %p79
      %p81 = scmp.ne.s32.totalorder %s67, %s68
      %p82 = scmp.eq.s32.totalorder %s20, 1
      %p83 = por %p81, %p82
      %p85 = scmp.ne.s32.totalorder %s68, %s84
      %p86 = scmp.eq.s32.totalorder %s20, 0
      %p87 = por %p85, %p86
      %s89 = sadd.s32 %s88, 1
      %p92 = scmp.eq.s32.totalorder %s14, 1
      %p93 = scmp.ne.s32.totalorder %s88, %s90
      %p94 = scmp.eq.s32.totalorder %s14, 0
      %p95 = por %p93, %p94
      %p96 = scmp.ne.s32.totalorder %s88, %s90
      %p97 = scmp.eq.s32.totalorder %s19, 1
      %p98 = por %p96, %p97
      %p99 = scmp.ne.s32.totalorder %s90, %s91
      %p100 = scmp.eq.s32.totalorder %s19, 0
      %p101 = por %p99, %p100
      %p102 = scmp.ne.s32.totalorder %s90, %s91
      %p103 = scmp.eq.s32.totalorder %s20, 1
      %p104 = por %p102, %p103
      %p106 = scmp.ne.s32.totalorder %s91, %s105
      %p107 = scmp.eq.s32.totalorder %s20, 0
      %p108 = por %p106, %p107
      %s110 = sadd.s32 %s109, 1
      %p113 = scmp.eq.s32.totalorder %s14, 1
      %p114 = scmp.ne.s32.totalorder %s109, %s111
      %p115 = scmp.eq.s32.totalorder %s14, 0
      %p116 = por %p114, %p115
      %p117 = scmp.ne.s32.totalorder %s109, %s111
      %p118 = scmp.eq.s32.totalorder %s19, 1
      %p119 = por %p117, %p118
      %p120 = scmp.ne.s32.totalorder %s111, %s112
      %p121 = scmp.eq.s32.totalorder %s19, 0
      %p122 = por %p120, %p121
      %p123 = scmp.ne.s32.totalorder %s111, %s112
      %p124 = scmp.eq.s32.totalorder %s20, 1
      %p125 = por %p123, %p124
      %p127 = scmp.ne.s32.totalorder %s112, %s126
      %p128 = scmp.eq.s32.totalorder %s20, 0
      %p129 = por %p127, %p128
      %s131 = sadd.s32 %s130, 1
      %p134 = scmp.eq.s32.totalorder %s14, 1
      %p135 = scmp.ne.s32.totalorder %s130, %s132
      %p136 = scmp.eq.s32.totalorder %s14, 0
      %p137 = por %p135, %p136
      %p138 = scmp.ne.s32.totalorder %s130, %s132
      %p139 = scmp.eq.s32.totalorder %s19, 1
      %p140 = por %p138, %p139
      %p141 = scmp.ne.s32.totalorder %s132, %s133
      %p142 = scmp.eq.s32.totalorder %s19, 0
      %p143 = por %p141, %p142
      %p144 = scmp.ne.s32.totalorder %s132, %s133
      %p145 = scmp.eq.s32.totalorder %s20, 1
      %p146 = por %p144, %p145
      %p148 = scmp.ne.s32.totalorder %s133, %s147
      %p149 = scmp.eq.s32.totalorder %s20, 0
      %p150 = por %p148, %p149
      %s152 = sadd.s32 %s151, 1
      %p155 = scmp.eq.s32.totalorder %s14, 1
      %p156 = scmp.ne.s32.totalorder %s151, %s153
      %p157 = scmp.eq.s32.totalorder %s14, 0
      %p158 = por %p156, %p157
      %p159 = scmp.ne.s32.totalorder %s151, %s153
      %p160 = scmp.eq.s32.totalorder %s19, 1
      %p161 = por %p159, %p160
      %p162 = scmp.ne.s32.totalorder %s153, %s154
      %p163 = scmp.eq.s32.totalorder %s19, 0
      %p164 = por %p162, %p163
      %p165 = scmp.ne.s32.totalorder %s153, %s154
      %p166 = scmp.eq.s32.totalorder %s20, 1
      %p167 = por %p165, %p166
      %p169 = scmp.ne.s32.totalorder %s154, %s168
      %p170 = scmp.eq.s32.totalorder %s20, 0
      %p171 = por %p169, %p170
      %s173 = sadd.s32 %s172, 1
      %p176 = scmp.eq.s32.totalorder %s14, 1
      %p177 = scmp.ne.s32.totalorder %s172, %s174
      %p178 = scmp.eq.s32.totalorder %s14, 0
      %p179 = por %p177, %p178
      %p180 = scmp.ne.s32.totalorder %s172, %s174
      %p181 = scmp.eq.s32.totalorder %s19, 1
      %p182 = por %p180, %p181
      %p183 = scmp.ne.s32.totalorder %s174, %s175
      %p184 = scmp.eq.s32.totalorder %s19, 0
      %p185 = por %p183, %p184
      %p186 = scmp.ne.s32.totalorder %s174, %s175
      %p187 = scmp.eq.s32.totalorder %s20, 1
      %p188 = por %p186, %p187
      %p190 = scmp.ne.s32.totalorder %s175, %s189
      %p191 = scmp.eq.s32.totalorder %s20, 0
      %p192 = por %p190, %p191
      %s193 = ssub.s32 %s21, %s33
      %p194 = scmp.eq.s32.totalorder %s193, 0
      %s196 = sadd.s32 %s195, 1
      %s197 = scalar_select %p194, %s195, %s196
      %p200 = pneg %p194
      %p201 = scmp.eq.s32.totalorder %s14, 1
      %p202 = por %p200, %p201
      %p203 = scmp.ne.s32.totalorder %s195, %s198
      %p204 = scmp.eq.s32.totalorder %s14, 0
      %p205 = por %p203, %p204
      %p206 = scmp.ne.s32.totalorder %s195, %s198
      %p207 = scmp.eq.s32.totalorder %s19, 1
      %p208 = por %p206, %p207
      %p209 = scmp.ne.s32.totalorder %s198, %s199
      %p210 = scmp.eq.s32.totalorder %s19, 0
      %p211 = por %p209, %p210
      %p212 = scmp.ne.s32.totalorder %s198, %s199
      %p213 = scmp.eq.s32.totalorder %s20, 1
      %p214 = por %p212, %p213
      %p216 = scmp.ne.s32.totalorder %s199, %s215
      %p217 = scmp.eq.s32.totalorder %s20, 0
      %p218 = por %p216, %p217
      %p219 = scmp.le.s32.totalorder 1, %s14
      %p220 = scmp.lt.s32.totalorder %s14, 3
      %p221 = pnand %p219, %p220
      %p222 = pneg %p221
      // Predicated region
      $region9: #{discriminator_forward.1} parent=5 // pred_check
        _
      $region10: #{discriminator_forward.1} parent=5 // pred_check_branch
        %224 = sbr.rel (%p221) target = $region12
      $region11: #{discriminator_forward.1} parent=5 // pred_region
        %s225 = ssub.s32 %s14, 1
        // Predicated region
        $region13: #{discriminator_forward.1} parent=11 // pred_check
          %p226 = pneg %p101
        $region14: #{discriminator_forward.1} parent=11 // pred_check_branch
          %228 = sbr.rel (%p226) target = $region16
        $region15: #{discriminator_forward.1} parent=11 // pred_region
          _
        $region16: #{discriminator_forward.1} parent=11 // pred_fallthru
          _
        // Predicated region
        $region17: #{discriminator_forward.1} parent=11 // pred_check
          %p229 = pneg %p122
        $region18: #{discriminator_forward.1} parent=11 // pred_check_branch
          %231 = sbr.rel (%p229) target = $region20
        $region19: #{discriminator_forward.1} parent=11 // pred_region
          _
        $region20: #{discriminator_forward.1} parent=11 // pred_fallthru
          _
        // Predicated region
        $region21: #{discriminator_forward.1} parent=11 // pred_check
          %p232 = pneg %p143
        $region22: #{discriminator_forward.1} parent=11 // pred_check_branch
          %234 = sbr.rel (%p232) target = $region24
        $region23: #{discriminator_forward.1} parent=11 // pred_region
          _
        $region24: #{discriminator_forward.1} parent=11 // pred_fallthru
          _
        // Predicated region
        $region25: #{discriminator_forward.1} parent=11 // pred_check
          %p235 = pneg %p164
        $region26: #{discriminator_forward.1} parent=11 // pred_check_branch
          %237 = sbr.rel (%p235) target = $region28
        $region27: #{discriminator_forward.1} parent=11 // pred_region
          _
        $region28: #{discriminator_forward.1} parent=11 // pred_fallthru
          _
        // Predicated region
        $region29: #{discriminator_forward.1} parent=11 // pred_check
          %p238 = pneg %p185
        $region30: #{discriminator_forward.1} parent=11 // pred_check_branch
          %240 = sbr.rel (%p238) target = $region32
        $region31: #{discriminator_forward.1} parent=11 // pred_region
          _
        $region32: #{discriminator_forward.1} parent=11 // pred_fallthru
          _
      $region12: #{discriminator_forward.1} parent=5 // pred_fallthru
        _
      %p241 = scmp.lt.s32.totalorder %s14, 2
      // Predicated region
      $region33: #{discriminator_forward.1} parent=5 // pred_check
        %p242 = pneg %p241
      $region34: #{discriminator_forward.1} parent=5 // pred_check_branch
        %244 = sbr.rel (%p242) target = $region36
      $region35: #{discriminator_forward.1} parent=5 // pred_region
        // Predicated region
        $region37: #{discriminator_forward.1} parent=35 // pred_check
          %p245 = pneg %p48
        $region38: #{discriminator_forward.1} parent=35 // pred_check_branch
          %247 = sbr.rel (%p245) target = $region40
        $region39: #{discriminator_forward.1} parent=35 // pred_region
          %s248 = sand.u32 %s38, 1
          %s249 = sand.u32 %s38, 1
          %s250 = smul.addr %s249, 32
          %s251 = scalar_lea.vmem [#allocation4], %s250
          %s252 = smul.u32 2, %s21
          %s253 = smul.u32 4, %s22
          %s254 = smul.addr %s252, 8
          %s255 = sadd.s32 %s253, %s254
          %s256 = smul.addr %s255, 4
          %s257 = scalar_lea.vmem %s0, %s256
          // Predicated region
          $region41: #{discriminator_forward.1} parent=39 // pred_check
            _
          $region42: #{discriminator_forward.1} parent=39 // pred_check_branch
            %259 = sbr.rel (0) target = $region44
          $region43: #{discriminator_forward.1} parent=39 // pred_region
            // Predicated region
            $region45: #{discriminator_forward.1} parent=43 // pred_check
              _
            $region46: #{discriminator_forward.1} parent=43 // pred_check_branch
              %261 = sbr.rel (0) target = $region48
            $region47: #{discriminator_forward.1} parent=43 // pred_region
              loop: start=0, step=1, limit=1
              $region49: #{discriminator_forward.1} parent=47 // loop_pre_header
                _
              $region50: #{discriminator_forward.1} parent=47 // loop_header
                %s263 = sphi 0, %s267
                %p264 = scmp.ge.s32.totalorder %s263, 1
                %s268 = sphi %s257, %s257
                %s269 = sphi %s251, %s251
              $region51: #{discriminator_forward.1} parent=47 // loop_header_branch
                %266 = sbr.rel (%p264) target = $region55
              $region52: #{discriminator_forward.1} parent=47 // loop_body
                %v270 = vld [vmem:[%s268] sm:$0xff]
                %271 = vst [vmem:[%s269] sm:$0xff] %v270
                %v272 = vld [vmem:[%s268 + $0x8] sm:$0xff]
                %273 = vst [vmem:[%s269 + $0x8] sm:$0xff] %v272
                %v274 = vld [vmem:[%s268 + $0x20] sm:$0xff]
                %275 = vst [vmem:[%s269 + $0x10] sm:$0xff] %v274
                %v276 = vld [vmem:[%s268 + $0x28] sm:$0xff]
                %277 = vst [vmem:[%s269 + $0x18] sm:$0xff] %v276
              $region53: #{discriminator_forward.1} parent=47 // loop_footer
                %s267 = sadd.s32 1, %s263
              $region54: #{discriminator_forward.1} parent=47 // loop_footer_branch
                %262 = sbr.rel target = $region50
              $region55: #{discriminator_forward.1} parent=47 // loop_exit
                _
            $region48: #{discriminator_forward.1} parent=43 // pred_fallthru
              _
            // Predicated region
            $region56: #{discriminator_forward.1} parent=43 // pred_check
              _
            $region57: #{discriminator_forward.1} parent=43 // pred_check_branch
              %279 = sbr.rel target = $region59
            $region58: #{discriminator_forward.1} parent=43 // pred_region
              _
            $region59: #{discriminator_forward.1} parent=43 // pred_fallthru
              _
          $region44: #{discriminator_forward.1} parent=39 // pred_fallthru
            _
          %280 = vnop
        $region40: #{discriminator_forward.1} parent=35 // pred_fallthru
          _
        // Predicated region
        $region60: #{discriminator_forward.1} parent=35 // pred_check
          %p281 = pneg %p74
        $region61: #{discriminator_forward.1} parent=35 // pred_check_branch
          %283 = sbr.rel (%p281) target = $region63
        $region62: #{discriminator_forward.1} parent=35 // pred_region
          %s284 = smul.u32 64, %s22
          %p285 = scmp.lt.s32.totalorder %s284, 127
          %s286 = scalar_select %p285, %s284, 127
          %s287 = smul.addr %s286, 4
          %s288 = smul.addr %s287, 4
          %s289 = scalar_lea.vmem %s1, %s288
          %s290 = smul.u32 64, %s22
        $region63: #{discriminator_forward.1} parent=35 // pred_fallthru
          _
      $region36: #{discriminator_forward.1} parent=5 // pred_fallthru
        _
      %p291 = scmp.le.s32.totalorder 1, %s14
      %p292 = scmp.lt.s32.totalorder %s14, 3
      %p293 = pnand %p291, %p292
      %p294 = pneg %p293
      // Predicated region
      $region64: #{discriminator_forward.1} parent=5 // pred_check
        _
      $region65: #{discriminator_forward.1} parent=5 // pred_check_branch
        %296 = sbr.rel (%p293) target = $region67
      $region66: #{discriminator_forward.1} parent=5 // pred_region
        %s297 = ssub.s32 %s14, 1
        %s298 = sand.u32 %s41, 1
        %s299 = sand.u32 %s41, 1
        %s300 = smul.addr %s299, 32
        %s301 = scalar_lea.vmem [#allocation4], %s300
        // Predicated region
        $region68: #{discriminator_forward.1} parent=66 // pred_check
          %p302 = pneg %p54
        $region69: #{discriminator_forward.1} parent=66 // pred_check_branch
          %304 = sbr.rel (%p302) target = $region71
        $region70: #{discriminator_forward.1} parent=66 // pred_region
          _
        $region71: #{discriminator_forward.1} parent=66 // pred_fallthru
          _
        %s305 = sand.u32 %s41, 1
        %s306 = sand.u32 %s41, 1
        %s307 = smul.addr %s306, 32
        %s308 = scalar_lea.vmem [#allocation4], %s307
        %p309 = pneg %p54
        %p310 = pneg %p51
        %s311 = smul.u32 64, %s24
        %p312 = scmp.lt.s32.totalorder %s311, 127
        %s313 = scalar_select %p312, %s311, 127
        %s314 = smul.addr %s313, 4
        %s315 = smul.addr %s314, 4
        %s316 = scalar_lea.vmem %s1, %s315
        %p317 = pneg %p80
        %p318 = pneg %p77
        %p319 = pneg %p101
        %p320 = pneg %p98
        %p321 = pneg %p122
        %p322 = pneg %p119
        %p323 = pneg %p143
        %p324 = pneg %p140
        %p325 = pneg %p164
        %p326 = pneg %p161
        %p327 = pneg %p185
        %p328 = pneg %p182
        %p329 = pneg %p211
        %p330 = pneg %p208
        %s331 = smul.u32 2, %s23
        %p332 = scmp.lt.s32.totalorder %s331, 1
        %s333 = scalar_select %p332, %s331, 1
        %s334 = smul.addr %s333, 8
        %s335 = scalar_lea.vmem %s7, %s334
        %s336 = smul.u32 2, %s23
        %s337 = smul.u32 4, %s24
        %s338 = smul.u32 64, %s24
        %p339 = scmp.lt.s32.totalorder %s338, 127
        %s340 = scalar_select %p339, %s338, 127
        %s341 = smul.addr %s340, 4
        %s342 = smul.addr %s341, 4
        %s343 = scalar_lea.vmem %s1, %s342
        %s344 = smul.u32 64, %s24
        %s345 = smul.u32 2, %s23
        %p346 = scmp.lt.s32.totalorder %s345, 1
        %s347 = scalar_select %p346, %s345, 1
        %s348 = smul.addr %s347, 8
        %s349 = scalar_lea.vmem %s7, %s348
        %s350 = smul.u32 2, %s23
        %p351 = scmp.eq.s32.totalorder %s24, 0
        // Predicated region
        $region72: #{discriminator_forward.1} parent=66 // pred_check
          %p352 = pneg %p351
        $region73: #{discriminator_forward.1} parent=66 // pred_check_branch
          %354 = sbr.rel (%p352) target = $region75
        $region74: #{discriminator_forward.1} parent=66 // pred_region
          %355 = vst [vmem:[#allocation2] sm:$0xff] 0.0
          %356 = vst [vmem:[#allocation2 + $0x8] sm:$0xff] 0.0
          %357 = vst [vmem:[#allocation2 + $0x10] sm:$0xff] 0.0
          %358 = vst [vmem:[#allocation2 + $0x18] sm:$0xff] 0.0
          %359 = vst [vmem:[#allocation2 + $0x20] sm:$0xff] 0.0
          %360 = vst [vmem:[#allocation2 + $0x28] sm:$0xff] 0.0
          %361 = vst [vmem:[#allocation2 + $0x30] sm:$0xff] 0.0
          %362 = vst [vmem:[#allocation2 + $0x38] sm:$0xff] 0.0
        $region75: #{discriminator_forward.1} parent=66 // pred_fallthru
          _
        %v363 = vld [vmem:[#allocation2] sm:$0xff]
        %v364 = vld [vmem:[#allocation2 + $0x8] sm:$0xff]
        %v365 = vld [vmem:[#allocation2 + $0x10] sm:$0xff]
        %v366 = vld [vmem:[#allocation2 + $0x18] sm:$0xff]
        %v367 = vld [vmem:[#allocation2 + $0x20] sm:$0xff]
        %v368 = vld [vmem:[#allocation2 + $0x28] sm:$0xff]
        %v369 = vld [vmem:[#allocation2 + $0x30] sm:$0xff]
        %v370 = vld [vmem:[#allocation2 + $0x38] sm:$0xff]
        %v371 = vld [vmem:[%s301] sm:$0xff]
        %v372 = vld [vmem:[%s301 + $0x8] sm:$0xff]
        %v373 = vld [vmem:[%s301 + $0x10] sm:$0xff]
        %v374 = vld [vmem:[%s301 + $0x18] sm:$0xff]
        %v375 = vld [vmem:[%s343] sm:$0xff]
        %v376 = vld [vmem:[%s343 + $0x8] sm:$0xff]
        %v377 = vld [vmem:[%s343 + $0x10] sm:$0xff]
        %v378 = vld [vmem:[%s343 + $0x18] sm:$0xff]
        %v379 = vld [vmem:[%s343 + $0x20] sm:$0xff]
        %v380 = vld [vmem:[%s343 + $0x28] sm:$0xff]
        %v381 = vld [vmem:[%s343 + $0x30] sm:$0xff]
        %v382 = vld [vmem:[%s343 + $0x38] sm:$0xff]
        %v383 = vld [vmem:[%s343 + $0x40] sm:$0xff]
        %v384 = vld [vmem:[%s343 + $0x48] sm:$0xff]
        %v385 = vld [vmem:[%s343 + $0x50] sm:$0xff]
        %v386 = vld [vmem:[%s343 + $0x58] sm:$0xff]
        %v387 = vld [vmem:[%s343 + $0x60] sm:$0xff]
        %v388 = vld [vmem:[%s343 + $0x68] sm:$0xff]
        %v389 = vld [vmem:[%s343 + $0x70] sm:$0xff]
        %v390 = vld [vmem:[%s343 + $0x78] sm:$0xff]
        %v391 = vld [vmem:[%s343 + $0x80] sm:$0xff]
        %v392 = vld [vmem:[%s343 + $0x88] sm:$0xff]
        %v393 = vld [vmem:[%s343 + $0x90] sm:$0xff]
        %v394 = vld [vmem:[%s343 + $0x98] sm:$0xff]
        %v395 = vld [vmem:[%s343 + $0xa0] sm:$0xff]
        %v396 = vld [vmem:[%s343 + $0xa8] sm:$0xff]
        %v397 = vld [vmem:[%s343 + $0xb0] sm:$0xff]
        %v398 = vld [vmem:[%s343 + $0xb8] sm:$0xff]
        %v399 = vld [vmem:[%s343 + $0xc0] sm:$0xff]
        %v400 = vld [vmem:[%s343 + $0xc8] sm:$0xff]
        %v401 = vld [vmem:[%s343 + $0xd0] sm:$0xff]
        %v402 = vld [vmem:[%s343 + $0xd8] sm:$0xff]
        %v403 = vld [vmem:[%s343 + $0xe0] sm:$0xff]
        %v404 = vld [vmem:[%s343 + $0xe8] sm:$0xff]
        %v405 = vld [vmem:[%s343 + $0xf0] sm:$0xff]
        %v406 = vld [vmem:[%s343 + $0xf8] sm:$0xff]
        %v407 = vld [vmem:[%s343 + $0x100] sm:$0xff]
        %v408 = vld [vmem:[%s343 + $0x108] sm:$0xff]
        %v409 = vld [vmem:[%s343 + $0x110] sm:$0xff]
        %v410 = vld [vmem:[%s343 + $0x118] sm:$0xff]
        %v411 = vld [vmem:[%s343 + $0x120] sm:$0xff]
        %v412 = vld [vmem:[%s343 + $0x128] sm:$0xff]
        %v413 = vld [vmem:[%s343 + $0x130] sm:$0xff]
        %v414 = vld [vmem:[%s343 + $0x138] sm:$0xff]
        %v415 = vld [vmem:[%s343 + $0x140] sm:$0xff]
        %v416 = vld [vmem:[%s343 + $0x148] sm:$0xff]
        %v417 = vld [vmem:[%s343 + $0x150] sm:$0xff]
        %v418 = vld [vmem:[%s343 + $0x158] sm:$0xff]
        %v419 = vld [vmem:[%s343 + $0x160] sm:$0xff]
        %v420 = vld [vmem:[%s343 + $0x168] sm:$0xff]
        %v421 = vld [vmem:[%s343 + $0x170] sm:$0xff]
        %v422 = vld [vmem:[%s343 + $0x178] sm:$0xff]
        %v423 = vld [vmem:[%s343 + $0x180] sm:$0xff]
        %v424 = vld [vmem:[%s343 + $0x188] sm:$0xff]
        %v425 = vld [vmem:[%s343 + $0x190] sm:$0xff]
        %v426 = vld [vmem:[%s343 + $0x198] sm:$0xff]
        %v427 = vld [vmem:[%s343 + $0x1a0] sm:$0xff]
        %v428 = vld [vmem:[%s343 + $0x1a8] sm:$0xff]
        %v429 = vld [vmem:[%s343 + $0x1b0] sm:$0xff]
        %v430 = vld [vmem:[%s343 + $0x1b8] sm:$0xff]
        %v431 = vld [vmem:[%s343 + $0x1c0] sm:$0xff]
        %v432 = vld [vmem:[%s343 + $0x1c8] sm:$0xff]
        %v433 = vld [vmem:[%s343 + $0x1d0] sm:$0xff]
        %v434 = vld [vmem:[%s343 + $0x1d8] sm:$0xff]
        %v435 = vld [vmem:[%s343 + $0x1e0] sm:$0xff]
        %v436 = vld [vmem:[%s343 + $0x1e8] sm:$0xff]
        %v437 = vld [vmem:[%s343 + $0x1f0] sm:$0xff]
        %v438 = vld [vmem:[%s343 + $0x1f8] sm:$0xff]
        %v439 = vld [vmem:[%s343 + $0x200] sm:$0xff]
        %v440 = vld [vmem:[%s343 + $0x208] sm:$0xff]
        %v441 = vld [vmem:[%s343 + $0x210] sm:$0xff]
        %v442 = vld [vmem:[%s343 + $0x218] sm:$0xff]
        %v443 = vld [vmem:[%s343 + $0x220] sm:$0xff]
        %v444 = vld [vmem:[%s343 + $0x228] sm:$0xff]
        %v445 = vld [vmem:[%s343 + $0x230] sm:$0xff]
        %v446 = vld [vmem:[%s343 + $0x238] sm:$0xff]
        %v447 = vld [vmem:[%s343 + $0x240] sm:$0xff]
        %v448 = vld [vmem:[%s343 + $0x248] sm:$0xff]
        %v449 = vld [vmem:[%s343 + $0x250] sm:$0xff]
        %v450 = vld [vmem:[%s343 + $0x258] sm:$0xff]
        %v451 = vld [vmem:[%s343 + $0x260] sm:$0xff]
        %v452 = vld [vmem:[%s343 + $0x268] sm:$0xff]
        %v453 = vld [vmem:[%s343 + $0x270] sm:$0xff]
        %v454 = vld [vmem:[%s343 + $0x278] sm:$0xff]
        %v455 = vld [vmem:[%s343 + $0x280] sm:$0xff]
        %v456 = vld [vmem:[%s343 + $0x288] sm:$0xff]
        %v457 = vld [vmem:[%s343 + $0x290] sm:$0xff]
        %v458 = vld [vmem:[%s343 + $0x298] sm:$0xff]
        %v459 = vld [vmem:[%s343 + $0x2a0] sm:$0xff]
        %v460 = vld [vmem:[%s343 + $0x2a8] sm:$0xff]
        %v461 = vld [vmem:[%s343 + $0x2b0] sm:$0xff]
        %v462 = vld [vmem:[%s343 + $0x2b8] sm:$0xff]
        %v463 = vld [vmem:[%s343 + $0x2c0] sm:$0xff]
        %v464 = vld [vmem:[%s343 + $0x2c8] sm:$0xff]
        %v465 = vld [vmem:[%s343 + $0x2d0] sm:$0xff]
        %v466 = vld [vmem:[%s343 + $0x2d8] sm:$0xff]
        %v467 = vld [vmem:[%s343 + $0x2e0] sm:$0xff]
        %v468 = vld [vmem:[%s343 + $0x2e8] sm:$0xff]
        %v469 = vld [vmem:[%s343 + $0x2f0] sm:$0xff]
        %v470 = vld [vmem:[%s343 + $0x2f8] sm:$0xff]
        %v471 = vld [vmem:[%s343 + $0x300] sm:$0xff]
        %v472 = vld [vmem:[%s343 + $0x308] sm:$0xff]
        %v473 = vld [vmem:[%s343 + $0x310] sm:$0xff]
        %v474 = vld [vmem:[%s343 + $0x318] sm:$0xff]
        %v475 = vld [vmem:[%s343 + $0x320] sm:$0xff]
        %v476 = vld [vmem:[%s343 + $0x328] sm:$0xff]
        %v477 = vld [vmem:[%s343 + $0x330] sm:$0xff]
        %v478 = vld [vmem:[%s343 + $0x338] sm:$0xff]
        %v479 = vld [vmem:[%s343 + $0x340] sm:$0xff]
        %v480 = vld [vmem:[%s343 + $0x348] sm:$0xff]
        %v481 = vld [vmem:[%s343 + $0x350] sm:$0xff]
        %v482 = vld [vmem:[%s343 + $0x358] sm:$0xff]
        %v483 = vld [vmem:[%s343 + $0x360] sm:$0xff]
        %v484 = vld [vmem:[%s343 + $0x368] sm:$0xff]
        %v485 = vld [vmem:[%s343 + $0x370] sm:$0xff]
        %v486 = vld [vmem:[%s343 + $0x378] sm:$0xff]
        %v487 = vld [vmem:[%s343 + $0x380] sm:$0xff]
        %v488 = vld [vmem:[%s343 + $0x388] sm:$0xff]
        %v489 = vld [vmem:[%s343 + $0x390] sm:$0xff]
        %v490 = vld [vmem:[%s343 + $0x398] sm:$0xff]
        %v491 = vld [vmem:[%s343 + $0x3a0] sm:$0xff]
        %v492 = vld [vmem:[%s343 + $0x3a8] sm:$0xff]
        %v493 = vld [vmem:[%s343 + $0x3b0] sm:$0xff]
        %v494 = vld [vmem:[%s343 + $0x3b8] sm:$0xff]
        %v495 = vld [vmem:[%s343 + $0x3c0] sm:$0xff]
        %v496 = vld [vmem:[%s343 + $0x3c8] sm:$0xff]
        %v497 = vld [vmem:[%s343 + $0x3d0] sm:$0xff]
        %v498 = vld [vmem:[%s343 + $0x3d8] sm:$0xff]
        %v499 = vld [vmem:[%s343 + $0x3e0] sm:$0xff]
        %v500 = vld [vmem:[%s343 + $0x3e8] sm:$0xff]
        %v501 = vld [vmem:[%s343 + $0x3f0] sm:$0xff]
        %v502 = vld [vmem:[%s343 + $0x3f8] sm:$0xff]
        %v507 = vunpack.c.l.b16 %v371
        %v508 = vunpack.c.h.b16 %v371
        %v509 = vunpack.c.l.b16 %v372
        %v510 = vunpack.c.h.b16 %v372
        %v511 = vunpack.c.l.b16 %v373
        %v512 = vunpack.c.h.b16 %v373
        %v513 = vunpack.c.l.b16 %v374
        %v514 = vunpack.c.h.b16 %v374
        %v515 = vpack.c.b16 %v511, %v507
        %v516 = vpack.c.b16 %v512, %v508
        %v517 = vpack.c.b16 %v513, %v509
        %v518 = vpack.c.b16 %v514, %v510
        %v651 = vunpack.c.l.b16 %v375
        %v652 = vunpack.c.h.b16 %v375
        %v653 = vunpack.c.l.b16 %v376
        %v654 = vunpack.c.h.b16 %v376
        %v655 = vunpack.c.l.b16 %v377
        %v656 = vunpack.c.h.b16 %v377
        %v657 = vunpack.c.l.b16 %v378
        %v658 = vunpack.c.h.b16 %v378
        %v659 = vunpack.c.l.b16 %v379
        %v660 = vunpack.c.h.b16 %v379
        %v661 = vunpack.c.l.b16 %v380
        %v662 = vunpack.c.h.b16 %v380
        %v663 = vunpack.c.l.b16 %v381
        %v664 = vunpack.c.h.b16 %v381
        %v665 = vunpack.c.l.b16 %v382
        %v666 = vunpack.c.h.b16 %v382
        %v667 = vunpack.c.l.b16 %v383
        %v668 = vunpack.c.h.b16 %v383
        %v669 = vunpack.c.l.b16 %v384
        %v670 = vunpack.c.h.b16 %v384
        %v671 = vunpack.c.l.b16 %v385
        %v672 = vunpack.c.h.b16 %v385
        %v673 = vunpack.c.l.b16 %v386
        %v674 = vunpack.c.h.b16 %v386
        %v675 = vunpack.c.l.b16 %v387
        %v676 = vunpack.c.h.b16 %v387
        %v677 = vunpack.c.l.b16 %v388
        %v678 = vunpack.c.h.b16 %v388
        %v679 = vunpack.c.l.b16 %v389
        %v680 = vunpack.c.h.b16 %v389
        %v681 = vunpack.c.l.b16 %v390
        %v682 = vunpack.c.h.b16 %v390
        %v683 = vunpack.c.l.b16 %v391
        %v684 = vunpack.c.h.b16 %v391
        %v685 = vunpack.c.l.b16 %v392
        %v686 = vunpack.c.h.b16 %v392
        %v687 = vunpack.c.l.b16 %v393
        %v688 = vunpack.c.h.b16 %v393
        %v689 = vunpack.c.l.b16 %v394
        %v690 = vunpack.c.h.b16 %v394
        %v691 = vunpack.c.l.b16 %v395
        %v692 = vunpack.c.h.b16 %v395
        %v693 = vunpack.c.l.b16 %v396
        %v694 = vunpack.c.h.b16 %v396
        %v695 = vunpack.c.l.b16 %v397
        %v696 = vunpack.c.h.b16 %v397
        %v697 = vunpack.c.l.b16 %v398
        %v698 = vunpack.c.h.b16 %v398
        %v699 = vunpack.c.l.b16 %v399
        %v700 = vunpack.c.h.b16 %v399
        %v701 = vunpack.c.l.b16 %v400
        %v702 = vunpack.c.h.b16 %v400
        %v703 = vunpack.c.l.b16 %v401
        %v704 = vunpack.c.h.b16 %v401
        %v705 = vunpack.c.l.b16 %v402
        %v706 = vunpack.c.h.b16 %v402
        %v707 = vunpack.c.l.b16 %v403
        %v708 = vunpack.c.h.b16 %v403
        %v709 = vunpack.c.l.b16 %v404
        %v710 = vunpack.c.h.b16 %v404
        %v711 = vunpack.c.l.b16 %v405
        %v712 = vunpack.c.h.b16 %v405
        %v713 = vunpack.c.l.b16 %v406
        %v714 = vunpack.c.h.b16 %v406
        %v715 = vunpack.c.l.b16 %v407
        %v716 = vunpack.c.h.b16 %v407
        %v717 = vunpack.c.l.b16 %v408
        %v718 = vunpack.c.h.b16 %v408
        %v719 = vunpack.c.l.b16 %v409
        %v720 = vunpack.c.h.b16 %v409
        %v721 = vunpack.c.l.b16 %v410
        %v722 = vunpack.c.h.b16 %v410
        %v723 = vunpack.c.l.b16 %v411
        %v724 = vunpack.c.h.b16 %v411
        %v725 = vunpack.c.l.b16 %v412
        %v726 = vunpack.c.h.b16 %v412
        %v727 = vunpack.c.l.b16 %v413
        %v728 = vunpack.c.h.b16 %v413
        %v729 = vunpack.c.l.b16 %v414
        %v730 = vunpack.c.h.b16 %v414
        %v731 = vunpack.c.l.b16 %v415
        %v732 = vunpack.c.h.b16 %v415
        %v733 = vunpack.c.l.b16 %v416
        %v734 = vunpack.c.h.b16 %v416
        %v735 = vunpack.c.l.b16 %v417
        %v736 = vunpack.c.h.b16 %v417
        %v737 = vunpack.c.l.b16 %v418
        %v738 = vunpack.c.h.b16 %v418
        %v739 = vunpack.c.l.b16 %v419
        %v740 = vunpack.c.h.b16 %v419
        %v741 = vunpack.c.l.b16 %v420
        %v742 = vunpack.c.h.b16 %v420
        %v743 = vunpack.c.l.b16 %v421
        %v744 = vunpack.c.h.b16 %v421
        %v745 = vunpack.c.l.b16 %v422
        %v746 = vunpack.c.h.b16 %v422
        %v747 = vunpack.c.l.b16 %v423
        %v748 = vunpack.c.h.b16 %v423
        %v749 = vunpack.c.l.b16 %v424
        %v750 = vunpack.c.h.b16 %v424
        %v751 = vunpack.c.l.b16 %v425
        %v752 = vunpack.c.h.b16 %v425
        %v753 = vunpack.c.l.b16 %v426
        %v754 = vunpack.c.h.b16 %v426
        %v755 = vunpack.c.l.b16 %v427
        %v756 = vunpack.c.h.b16 %v427
        %v757 = vunpack.c.l.b16 %v428
        %v758 = vunpack.c.h.b16 %v428
        %v759 = vunpack.c.l.b16 %v429
        %v760 = vunpack.c.h.b16 %v429
        %v761 = vunpack.c.l.b16 %v430
        %v762 = vunpack.c.h.b16 %v430
        %v763 = vunpack.c.l.b16 %v431
        %v764 = vunpack.c.h.b16 %v431
        %v765 = vunpack.c.l.b16 %v432
        %v766 = vunpack.c.h.b16 %v432
        %v767 = vunpack.c.l.b16 %v433
        %v768 = vunpack.c.h.b16 %v433
        %v769 = vunpack.c.l.b16 %v434
        %v770 = vunpack.c.h.b16 %v434
        %v771 = vunpack.c.l.b16 %v435
        %v772 = vunpack.c.h.b16 %v435
        %v773 = vunpack.c.l.b16 %v436
        %v774 = vunpack.c.h.b16 %v436
        %v775 = vunpack.c.l.b16 %v437
        %v776 = vunpack.c.h.b16 %v437
        %v777 = vunpack.c.l.b16 %v438
        %v778 = vunpack.c.h.b16 %v438
        %v779 = vunpack.c.l.b16 %v439
        %v780 = vunpack.c.h.b16 %v439
        %v781 = vunpack.c.l.b16 %v440
        %v782 = vunpack.c.h.b16 %v440
        %v783 = vunpack.c.l.b16 %v441
        %v784 = vunpack.c.h.b16 %v441
        %v785 = vunpack.c.l.b16 %v442
        %v786 = vunpack.c.h.b16 %v442
        %v787 = vunpack.c.l.b16 %v443
        %v788 = vunpack.c.h.b16 %v443
        %v789 = vunpack.c.l.b16 %v444
        %v790 = vunpack.c.h.b16 %v444
        %v791 = vunpack.c.l.b16 %v445
        %v792 = vunpack.c.h.b16 %v445
        %v793 = vunpack.c.l.b16 %v446
        %v794 = vunpack.c.h.b16 %v446
        %v795 = vunpack.c.l.b16 %v447
        %v796 = vunpack.c.h.b16 %v447
        %v797 = vunpack.c.l.b16 %v448
        %v798 = vunpack.c.h.b16 %v448
        %v799 = vunpack.c.l.b16 %v449
        %v800 = vunpack.c.h.b16 %v449
        %v801 = vunpack.c.l.b16 %v450
        %v802 = vunpack.c.h.b16 %v450
        %v803 = vunpack.c.l.b16 %v451
        %v804 = vunpack.c.h.b16 %v451
        %v805 = vunpack.c.l.b16 %v452
        %v806 = vunpack.c.h.b16 %v452
        %v807 = vunpack.c.l.b16 %v453
        %v808 = vunpack.c.h.b16 %v453
        %v809 = vunpack.c.l.b16 %v454
        %v810 = vunpack.c.h.b16 %v454
        %v811 = vunpack.c.l.b16 %v455
        %v812 = vunpack.c.h.b16 %v455
        %v813 = vunpack.c.l.b16 %v456
        %v814 = vunpack.c.h.b16 %v456
        %v815 = vunpack.c.l.b16 %v457
        %v816 = vunpack.c.h.b16 %v457
        %v817 = vunpack.c.l.b16 %v458
        %v818 = vunpack.c.h.b16 %v458
        %v819 = vunpack.c.l.b16 %v459
        %v820 = vunpack.c.h.b16 %v459
        %v821 = vunpack.c.l.b16 %v460
        %v822 = vunpack.c.h.b16 %v460
        %v823 = vunpack.c.l.b16 %v461
        %v824 = vunpack.c.h.b16 %v461
        %v825 = vunpack.c.l.b16 %v462
        %v826 = vunpack.c.h.b16 %v462
        %v827 = vunpack.c.l.b16 %v463
        %v828 = vunpack.c.h.b16 %v463
        %v829 = vunpack.c.l.b16 %v464
        %v830 = vunpack.c.h.b16 %v464
        %v831 = vunpack.c.l.b16 %v465
        %v832 = vunpack.c.h.b16 %v465
        %v833 = vunpack.c.l.b16 %v466
        %v834 = vunpack.c.h.b16 %v466
        %v835 = vunpack.c.l.b16 %v467
        %v836 = vunpack.c.h.b16 %v467
        %v837 = vunpack.c.l.b16 %v468
        %v838 = vunpack.c.h.b16 %v468
        %v839 = vunpack.c.l.b16 %v469
        %v840 = vunpack.c.h.b16 %v469
        %v841 = vunpack.c.l.b16 %v470
        %v842 = vunpack.c.h.b16 %v470
        %v843 = vunpack.c.l.b16 %v471
        %v844 = vunpack.c.h.b16 %v471
        %v845 = vunpack.c.l.b16 %v472
        %v846 = vunpack.c.h.b16 %v472
        %v847 = vunpack.c.l.b16 %v473
        %v848 = vunpack.c.h.b16 %v473
        %v849 = vunpack.c.l.b16 %v474
        %v850 = vunpack.c.h.b16 %v474
        %v851 = vunpack.c.l.b16 %v475
        %v852 = vunpack.c.h.b16 %v475
        %v853 = vunpack.c.l.b16 %v476
        %v854 = vunpack.c.h.b16 %v476
        %v855 = vunpack.c.l.b16 %v477
        %v856 = vunpack.c.h.b16 %v477
        %v857 = vunpack.c.l.b16 %v478
        %v858 = vunpack.c.h.b16 %v478
        %v859 = vunpack.c.l.b16 %v479
        %v860 = vunpack.c.h.b16 %v479
        %v861 = vunpack.c.l.b16 %v480
        %v862 = vunpack.c.h.b16 %v480
        %v863 = vunpack.c.l.b16 %v481
        %v864 = vunpack.c.h.b16 %v481
        %v865 = vunpack.c.l.b16 %v482
        %v866 = vunpack.c.h.b16 %v482
        %v867 = vunpack.c.l.b16 %v483
        %v868 = vunpack.c.h.b16 %v483
        %v869 = vunpack.c.l.b16 %v484
        %v870 = vunpack.c.h.b16 %v484
        %v871 = vunpack.c.l.b16 %v485
        %v872 = vunpack.c.h.b16 %v485
        %v873 = vunpack.c.l.b16 %v486
        %v874 = vunpack.c.h.b16 %v486
        %v875 = vunpack.c.l.b16 %v487
        %v876 = vunpack.c.h.b16 %v487
        %v877 = vunpack.c.l.b16 %v488
        %v878 = vunpack.c.h.b16 %v488
        %v879 = vunpack.c.l.b16 %v489
        %v880 = vunpack.c.h.b16 %v489
        %v881 = vunpack.c.l.b16 %v490
        %v882 = vunpack.c.h.b16 %v490
        %v883 = vunpack.c.l.b16 %v491
        %v884 = vunpack.c.h.b16 %v491
        %v885 = vunpack.c.l.b16 %v492
        %v886 = vunpack.c.h.b16 %v492
        %v887 = vunpack.c.l.b16 %v493
        %v888 = vunpack.c.h.b16 %v493
        %v889 = vunpack.c.l.b16 %v494
        %v890 = vunpack.c.h.b16 %v494
        %v891 = vunpack.c.l.b16 %v495
        %v892 = vunpack.c.h.b16 %v495
        %v893 = vunpack.c.l.b16 %v496
        %v894 = vunpack.c.h.b16 %v496
        %v895 = vunpack.c.l.b16 %v497
        %v896 = vunpack.c.h.b16 %v497
        %v897 = vunpack.c.l.b16 %v498
        %v898 = vunpack.c.h.b16 %v498
        %v899 = vunpack.c.l.b16 %v499
        %v900 = vunpack.c.h.b16 %v499
        %v901 = vunpack.c.l.b16 %v500
        %v902 = vunpack.c.h.b16 %v500
        %v903 = vunpack.c.l.b16 %v501
        %v904 = vunpack.c.h.b16 %v501
        %v905 = vunpack.c.l.b16 %v502
        %v906 = vunpack.c.h.b16 %v502
        %v907 = vpack.c.b16 %v655, %v651
        %v908 = vpack.c.b16 %v656, %v652
        %v909 = vpack.c.b16 %v657, %v653
        %v910 = vpack.c.b16 %v658, %v654
        %v911 = vpack.c.b16 %v663, %v659
        %v912 = vpack.c.b16 %v664, %v660
        %v913 = vpack.c.b16 %v665, %v661
        %v914 = vpack.c.b16 %v666, %v662
        %v915 = vpack.c.b16 %v671, %v667
        %v916 = vpack.c.b16 %v672, %v668
        %v917 = vpack.c.b16 %v673, %v669
        %v918 = vpack.c.b16 %v674, %v670
        %v919 = vpack.c.b16 %v679, %v675
        %v920 = vpack.c.b16 %v680, %v676
        %v921 = vpack.c.b16 %v681, %v677
        %v922 = vpack.c.b16 %v682, %v678
        %v923 = vpack.c.b16 %v687, %v683
        %v924 = vpack.c.b16 %v688, %v684
        %v925 = vpack.c.b16 %v689, %v685
        %v926 = vpack.c.b16 %v690, %v686
        %v927 = vpack.c.b16 %v695, %v691
        %v928 = vpack.c.b16 %v696, %v692
        %v929 = vpack.c.b16 %v697, %v693
        %v930 = vpack.c.b16 %v698, %v694
        %v931 = vpack.c.b16 %v703, %v699
        %v932 = vpack.c.b16 %v704, %v700
        %v933 = vpack.c.b16 %v705, %v701
        %v934 = vpack.c.b16 %v706, %v702
        %v935 = vpack.c.b16 %v711, %v707
        %v936 = vpack.c.b16 %v712, %v708
        %v937 = vpack.c.b16 %v713, %v709
        %v938 = vpack.c.b16 %v714, %v710
        %v939 = vpack.c.b16 %v719, %v715
        %v940 = vpack.c.b16 %v720, %v716
        %v941 = vpack.c.b16 %v721, %v717
        %v942 = vpack.c.b16 %v722, %v718
        %v943 = vpack.c.b16 %v727, %v723
        %v944 = vpack.c.b16 %v728, %v724
        %v945 = vpack.c.b16 %v729, %v725
        %v946 = vpack.c.b16 %v730, %v726
        %v947 = vpack.c.b16 %v735, %v731
        %v948 = vpack.c.b16 %v736, %v732
        %v949 = vpack.c.b16 %v737, %v733
        %v950 = vpack.c.b16 %v738, %v734
        %v951 = vpack.c.b16 %v743, %v739
        %v952 = vpack.c.b16 %v744, %v740
        %v953 = vpack.c.b16 %v745, %v741
        %v954 = vpack.c.b16 %v746, %v742
        %v955 = vpack.c.b16 %v751, %v747
        %v956 = vpack.c.b16 %v752, %v748
        %v957 = vpack.c.b16 %v753, %v749
        %v958 = vpack.c.b16 %v754, %v750
        %v959 = vpack.c.b16 %v759, %v755
        %v960 = vpack.c.b16 %v760, %v756
        %v961 = vpack.c.b16 %v761, %v757
        %v962 = vpack.c.b16 %v762, %v758
        %v963 = vpack.c.b16 %v767, %v763
        %v964 = vpack.c.b16 %v768, %v764
        %v965 = vpack.c.b16 %v769, %v765
        %v966 = vpack.c.b16 %v770, %v766
        %v967 = vpack.c.b16 %v775, %v771
        %v968 = vpack.c.b16 %v776, %v772
        %v969 = vpack.c.b16 %v777, %v773
        %v970 = vpack.c.b16 %v778, %v774
        %v971 = vpack.c.b16 %v783, %v779
        %v972 = vpack.c.b16 %v784, %v780
        %v973 = vpack.c.b16 %v785, %v781
        %v974 = vpack.c.b16 %v786, %v782
        %v975 = vpack.c.b16 %v791, %v787
        %v976 = vpack.c.b16 %v792, %v788
        %v977 = vpack.c.b16 %v793, %v789
        %v978 = vpack.c.b16 %v794, %v790
        %v979 = vpack.c.b16 %v799, %v795
        %v980 = vpack.c.b16 %v800, %v796
        %v981 = vpack.c.b16 %v801, %v797
        %v982 = vpack.c.b16 %v802, %v798
        %v983 = vpack.c.b16 %v807, %v803
        %v984 = vpack.c.b16 %v808, %v804
        %v985 = vpack.c.b16 %v809, %v805
        %v986 = vpack.c.b16 %v810, %v806
        %v987 = vpack.c.b16 %v815, %v811
        %v988 = vpack.c.b16 %v816, %v812
        %v989 = vpack.c.b16 %v817, %v813
        %v990 = vpack.c.b16 %v818, %v814
        %v991 = vpack.c.b16 %v823, %v819
        %v992 = vpack.c.b16 %v824, %v820
        %v993 = vpack.c.b16 %v825, %v821
        %v994 = vpack.c.b16 %v826, %v822
        %v995 = vpack.c.b16 %v831, %v827
        %v996 = vpack.c.b16 %v832, %v828
        %v997 = vpack.c.b16 %v833, %v829
        %v998 = vpack.c.b16 %v834, %v830
        %v999 = vpack.c.b16 %v839, %v835
        %v1000 = vpack.c.b16 %v840, %v836
        %v1001 = vpack.c.b16 %v841, %v837
        %v1002 = vpack.c.b16 %v842, %v838
        %v1003 = vpack.c.b16 %v847, %v843
        %v1004 = vpack.c.b16 %v848, %v844
        %v1005 = vpack.c.b16 %v849, %v845
        %v1006 = vpack.c.b16 %v850, %v846
        %v1007 = vpack.c.b16 %v855, %v851
        %v1008 = vpack.c.b16 %v856, %v852
        %v1009 = vpack.c.b16 %v857, %v853
        %v1010 = vpack.c.b16 %v858, %v854
        %v1011 = vpack.c.b16 %v863, %v859
        %v1012 = vpack.c.b16 %v864, %v860
        %v1013 = vpack.c.b16 %v865, %v861
        %v1014 = vpack.c.b16 %v866, %v862
        %v1015 = vpack.c.b16 %v871, %v867
        %v1016 = vpack.c.b16 %v872, %v868
        %v1017 = vpack.c.b16 %v873, %v869
        %v1018 = vpack.c.b16 %v874, %v870
        %v1019 = vpack.c.b16 %v879, %v875
        %v1020 = vpack.c.b16 %v880, %v876
        %v1021 = vpack.c.b16 %v881, %v877
        %v1022 = vpack.c.b16 %v882, %v878
        %v1023 = vpack.c.b16 %v887, %v883
        %v1024 = vpack.c.b16 %v888, %v884
        %v1025 = vpack.c.b16 %v889, %v885
        %v1026 = vpack.c.b16 %v890, %v886
        %v1027 = vpack.c.b16 %v895, %v891
        %v1028 = vpack.c.b16 %v896, %v892
        %v1029 = vpack.c.b16 %v897, %v893
        %v1030 = vpack.c.b16 %v898, %v894
        %v1031 = vpack.c.b16 %v903, %v899
        %v1032 = vpack.c.b16 %v904, %v900
        %v1033 = vpack.c.b16 %v905, %v901
        %v1034 = vpack.c.b16 %v906, %v902
        %1163 = vmatprep.subr.bf16.mxu0 %v936
        %1164 = vmatpush1.bf16.msra.mxu0 %v935
        %1165 = vmatprep.subr.bf16.mxu0 %v932
        %1166 = vmatpush1.bf16.msra.mxu0 %v931
        %1167 = vmatprep.subr.bf16.mxu0 %v928
        %1168 = vmatpush1.bf16.msra.mxu0 %v927
        %1169 = vmatprep.subr.bf16.mxu0 %v924
        %1170 = vmatpush1.bf16.msra.mxu0 %v923
        %1171 = vmatprep.subr.bf16.mxu0 %v920
        %1172 = vmatpush1.bf16.msra.mxu0 %v919
        %1173 = vmatprep.subr.bf16.mxu0 %v916
        %1174 = vmatpush1.bf16.msra.mxu0 %v915
        %1175 = vmatprep.subr.bf16.mxu0 %v912
        %1176 = vmatpush1.bf16.msra.mxu0 %v911
        %1177 = vmatprep.subr.bf16.mxu0 %v908
        %1178 = vmatpush1.bf16.msra.mxu0 %v907
        %1179 = vmatprep.subr.bf16.mxu0 %v968
        %1180 = vmatpush2.bf16.msra.mxu0 %v967
        %1181 = vmatprep.subr.bf16.mxu0 %v964
        %1182 = vmatpush2.bf16.msra.mxu0 %v963
        %1183 = vmatprep.subr.bf16.mxu0 %v960
        %1184 = vmatpush2.bf16.msra.mxu0 %v959
        %1185 = vmatprep.subr.bf16.mxu0 %v956
        %1186 = vmatpush2.bf16.msra.mxu0 %v955
        %1187 = vmatprep.subr.bf16.mxu0 %v952
        %1188 = vmatpush2.bf16.msra.mxu0 %v951
        %1189 = vmatprep.subr.bf16.mxu0 %v948
        %1190 = vmatpush2.bf16.msra.mxu0 %v947
        %1191 = vmatprep.subr.bf16.mxu0 %v944
        %1192 = vmatpush2.bf16.msra.mxu0 %v943
        %1193 = vmatprep.subr.bf16.mxu0 %v940
        %1194 = vmatpush2.bf16.msra.mxu0 %v939
        %1195 = vmatprep.mubr.bf16.mxu0 %v516
        %1196 = vmatmul.mubr.bf16.gmra.mxu0 %v515
        %v1197 = vpop.f32.mrf.mxu0
        %v1198 = vadd.f32 0.0, %v1197
        %v1199 = vpop.f32.mrf.mxu0
        %v1200 = vadd.f32 0.0, %v1199
        %v1201 = vpop.f32.mrf.mxu0
        %v1202 = vadd.f32 0.0, %v1201
        %v1203 = vpop.f32.mrf.mxu0
        %v1204 = vadd.f32 0.0, %v1203
        %1205 = vdwg.mxu0
        %1206 = vmatprep.subr.bf16.mxu0 %v1000
        %1207 = vmatpush1.bf16.msra.mxu0 %v999
        %1208 = vmatprep.subr.bf16.mxu0 %v996
        %1209 = vmatpush1.bf16.msra.mxu0 %v995
        %1210 = vmatprep.subr.bf16.mxu0 %v992
        %1211 = vmatpush1.bf16.msra.mxu0 %v991
        %1212 = vmatprep.subr.bf16.mxu0 %v988
        %1213 = vmatpush1.bf16.msra.mxu0 %v987
        %1214 = vmatprep.subr.bf16.mxu0 %v984
        %1215 = vmatpush1.bf16.msra.mxu0 %v983
        %1216 = vmatprep.subr.bf16.mxu0 %v980
        %1217 = vmatpush1.bf16.msra.mxu0 %v979
        %1218 = vmatprep.subr.bf16.mxu0 %v976
        %1219 = vmatpush1.bf16.msra.mxu0 %v975
        %1220 = vmatprep.subr.bf16.mxu0 %v972
        %1221 = vmatpush1.bf16.msra.mxu0 %v971
        %1222 = vmatprep.subr.bf16.mxu0 %v1032
        %1223 = vmatpush2.bf16.msra.mxu0 %v1031
        %1224 = vmatprep.subr.bf16.mxu0 %v1028
        %1225 = vmatpush2.bf16.msra.mxu0 %v1027
        %1226 = vmatprep.subr.bf16.mxu0 %v1024
        %1227 = vmatpush2.bf16.msra.mxu0 %v1023
        %1228 = vmatprep.subr.bf16.mxu0 %v1020
        %1229 = vmatpush2.bf16.msra.mxu0 %v1019
        %1230 = vmatprep.subr.bf16.mxu0 %v1016
        %1231 = vmatpush2.bf16.msra.mxu0 %v1015
        %1232 = vmatprep.subr.bf16.mxu0 %v1012
        %1233 = vmatpush2.bf16.msra.mxu0 %v1011
        %1234 = vmatprep.subr.bf16.mxu0 %v1008
        %1235 = vmatpush2.bf16.msra.mxu0 %v1007
        %1236 = vmatprep.subr.bf16.mxu0 %v1004
        %1237 = vmatpush2.bf16.msra.mxu0 %v1003
        %1238 = vmatprep.mubr.bf16.mxu0 %v518
        %1239 = vmatmul.mubr.bf16.gmra.mxu0 %v517
        %v1240 = vpop.f32.mrf.mxu0
        %v1241 = vadd.f32 %v1198, %v1240
        %v1242 = vpop.f32.mrf.mxu0
        %v1243 = vadd.f32 %v1200, %v1242
        %v1244 = vpop.f32.mrf.mxu0
        %v1245 = vadd.f32 %v1202, %v1244
        %v1246 = vpop.f32.mrf.mxu0
        %v1247 = vadd.f32 %v1204, %v1246
        %1248 = vdwg.mxu0
        %1249 = vmatprep.subr.bf16.mxu0 %v938
        %1250 = vmatpush1.bf16.msra.mxu0 %v937
        %1251 = vmatprep.subr.bf16.mxu0 %v934
        %1252 = vmatpush1.bf16.msra.mxu0 %v933
        %1253 = vmatprep.subr.bf16.mxu0 %v930
        %1254 = vmatpush1.bf16.msra.mxu0 %v929
        %1255 = vmatprep.subr.bf16.mxu0 %v926
        %1256 = vmatpush1.bf16.msra.mxu0 %v925
        %1257 = vmatprep.subr.bf16.mxu0 %v922
        %1258 = vmatpush1.bf16.msra.mxu0 %v921
        %1259 = vmatprep.subr.bf16.mxu0 %v918
        %1260 = vmatpush1.bf16.msra.mxu0 %v917
        %1261 = vmatprep.subr.bf16.mxu0 %v914
        %1262 = vmatpush1.bf16.msra.mxu0 %v913
        %1263 = vmatprep.subr.bf16.mxu0 %v910
        %1264 = vmatpush1.bf16.msra.mxu0 %v909
        %1265 = vmatprep.subr.bf16.mxu0 %v970
        %1266 = vmatpush2.bf16.msra.mxu0 %v969
        %1267 = vmatprep.subr.bf16.mxu0 %v966
        %1268 = vmatpush2.bf16.msra.mxu0 %v965
        %1269 = vmatprep.subr.bf16.mxu0 %v962
        %1270 = vmatpush2.bf16.msra.mxu0 %v961
        %1271 = vmatprep.subr.bf16.mxu0 %v958
        %1272 = vmatpush2.bf16.msra.mxu0 %v957
        %1273 = vmatprep.subr.bf16.mxu0 %v954
        %1274 = vmatpush2.bf16.msra.mxu0 %v953
        %1275 = vmatprep.subr.bf16.mxu0 %v950
        %1276 = vmatpush2.bf16.msra.mxu0 %v949
        %1277 = vmatprep.subr.bf16.mxu0 %v946
        %1278 = vmatpush2.bf16.msra.mxu0 %v945
        %1279 = vmatprep.subr.bf16.mxu0 %v942
        %1280 = vmatpush2.bf16.msra.mxu0 %v941
        %1281 = vmatprep.mubr.bf16.mxu0 %v516
        %1282 = vmatmul.mubr.bf16.gmra.mxu0 %v515
        %v1283 = vpop.f32.mrf.mxu0
        %v1284 = vadd.f32 0.0, %v1283
        %v1285 = vpop.f32.mrf.mxu0
        %v1286 = vadd.f32 0.0, %v1285
        %v1287 = vpop.f32.mrf.mxu0
        %v1288 = vadd.f32 0.0, %v1287
        %v1289 = vpop.f32.mrf.mxu0
        %v1290 = vadd.f32 0.0, %v1289
        %1291 = vdwg.mxu0
        %1292 = vmatprep.subr.bf16.mxu0 %v1002
        %1293 = vmatpush1.bf16.msra.mxu0 %v1001
        %1294 = vmatprep.subr.bf16.mxu0 %v998
        %1295 = vmatpush1.bf16.msra.mxu0 %v997
        %1296 = vmatprep.subr.bf16.mxu0 %v994
        %1297 = vmatpush1.bf16.msra.mxu0 %v993
        %1298 = vmatprep.subr.bf16.mxu0 %v990
        %1299 = vmatpush1.bf16.msra.mxu0 %v989
        %1300 = vmatprep.subr.bf16.mxu0 %v986
        %1301 = vmatpush1.bf16.msra.mxu0 %v985
        %1302 = vmatprep.subr.bf16.mxu0 %v982
        %1303 = vmatpush1.bf16.msra.mxu0 %v981
        %1304 = vmatprep.subr.bf16.mxu0 %v978
        %1305 = vmatpush1.bf16.msra.mxu0 %v977
        %1306 = vmatprep.subr.bf16.mxu0 %v974
        %1307 = vmatpush1.bf16.msra.mxu0 %v973
        %1308 = vmatprep.subr.bf16.mxu0 %v1034
        %1309 = vmatpush2.bf16.msra.mxu0 %v1033
        %1310 = vmatprep.subr.bf16.mxu0 %v1030
        %1311 = vmatpush2.bf16.msra.mxu0 %v1029
        %1312 = vmatprep.subr.bf16.mxu0 %v1026
        %1313 = vmatpush2.bf16.msra.mxu0 %v1025
        %1314 = vmatprep.subr.bf16.mxu0 %v1022
        %1315 = vmatpush2.bf16.msra.mxu0 %v1021
        %1316 = vmatprep.subr.bf16.mxu0 %v1018
        %1317 = vmatpush2.bf16.msra.mxu0 %v1017
        %1318 = vmatprep.subr.bf16.mxu0 %v1014
        %1319 = vmatpush2.bf16.msra.mxu0 %v1013
        %1320 = vmatprep.subr.bf16.mxu0 %v1010
        %1321 = vmatpush2.bf16.msra.mxu0 %v1009
        %1322 = vmatprep.subr.bf16.mxu0 %v1006
        %1323 = vmatpush2.bf16.msra.mxu0 %v1005
        %1324 = vmatprep.mubr.bf16.mxu0 %v518
        %1325 = vmatmul.mubr.bf16.gmra.mxu0 %v517
        %v1326 = vpop.f32.mrf.mxu0
        %v1327 = vadd.f32 %v1284, %v1326
        %v1328 = vpop.f32.mrf.mxu0
        %v1329 = vadd.f32 %v1286, %v1328
        %v1330 = vpop.f32.mrf.mxu0
        %v1331 = vadd.f32 %v1288, %v1330
        %v1332 = vpop.f32.mrf.mxu0
        %v1333 = vadd.f32 %v1290, %v1332
        %1334 = vdwg.mxu0
        %v1335 = vadd.f32 %v363, %v1241
        %v1336 = vadd.f32 %v364, %v1243
        %v1337 = vadd.f32 %v365, %v1327
        %v1338 = vadd.f32 %v366, %v1329
        %v1339 = vadd.f32 %v367, %v1245
        %v1340 = vadd.f32 %v368, %v1247
        %v1341 = vadd.f32 %v369, %v1331
        %v1342 = vadd.f32 %v370, %v1333
        %1343 = vst [vmem:[#allocation2] sm:$0xff] %v1335
        %1344 = vst [vmem:[#allocation2 + $0x8] sm:$0xff] %v1336
        %1345 = vst [vmem:[#allocation2 + $0x10] sm:$0xff] %v1337
        %1346 = vst [vmem:[#allocation2 + $0x18] sm:$0xff] %v1338
        %1347 = vst [vmem:[#allocation2 + $0x20] sm:$0xff] %v1339
        %1348 = vst [vmem:[#allocation2 + $0x28] sm:$0xff] %v1340
        %1349 = vst [vmem:[#allocation2 + $0x30] sm:$0xff] %v1341
        %1350 = vst [vmem:[#allocation2 + $0x38] sm:$0xff] %v1342
        %p1351 = scmp.eq.s32.totalorder %s24, 1
        // Predicated region
        $region76: #{discriminator_forward.1} parent=66 // pred_check
          %p1352 = pneg %p1351
        $region77: #{discriminator_forward.1} parent=66 // pred_check_branch
          %1354 = sbr.rel (%p1352) target = $region79
        $region78: #{discriminator_forward.1} parent=66 // pred_region
          %v1355 = vld [vmem:[#allocation2] sm:$0xff]
          %v1356 = vld [vmem:[#allocation2 + $0x8] sm:$0xff]
          %v1357 = vld [vmem:[#allocation2 + $0x10] sm:$0xff]
          %v1358 = vld [vmem:[#allocation2 + $0x18] sm:$0xff]
          %v1359 = vld [vmem:[#allocation2 + $0x20] sm:$0xff]
          %v1360 = vld [vmem:[#allocation2 + $0x28] sm:$0xff]
          %v1361 = vld [vmem:[#allocation2 + $0x30] sm:$0xff]
          %v1362 = vld [vmem:[#allocation2 + $0x38] sm:$0xff]
          %v1363 = vld [vmem:[%s2] sm:$0xf]
          %v1365 = vlaneseq
          %v1366 = vshrl.u32 %v1365, 7
          %v1367 = vsub.s32 0, %v1366
          %v1368 = vrot.slane %v1363, %v1367
          %v1369 = vlaneseq
          %v1370 = vshrl.u32 %v1369, 7
          %v1371 = vsub.s32 1, %v1370
          %v1372 = vrot.slane %v1363, %v1371
          %v1373 = vlaneseq
          %v1374 = vshrl.u32 %v1373, 7
          %v1375 = vsub.s32 2, %v1374
          %v1376 = vrot.slane %v1363, %v1375
          %v1377 = vlaneseq
          %v1378 = vshrl.u32 %v1377, 7
          %v1379 = vsub.s32 3, %v1378
          %v1380 = vrot.slane %v1363, %v1379
          %v1385 = vadd.f32 %v1355, %v1368
          %v1386 = vadd.f32 %v1356, %v1372
          %v1387 = vadd.f32 %v1357, %v1376
          %v1388 = vadd.f32 %v1358, %v1380
          %v1389 = vadd.f32 %v1359, %v1368
          %v1390 = vadd.f32 %v1360, %v1372
          %v1391 = vadd.f32 %v1361, %v1376
          %v1392 = vadd.f32 %v1362, %v1380
          %vm1393 = vcmp.gt.f32.partialorder %v1385, 0.0
          %vm1394 = vcmp.gt.f32.partialorder %v1386, 0.0
          %vm1395 = vcmp.gt.f32.partialorder %v1387, 0.0
          %vm1396 = vcmp.gt.f32.partialorder %v1388, 0.0
          %vm1397 = vcmp.gt.f32.partialorder %v1389, 0.0
          %vm1398 = vcmp.gt.f32.partialorder %v1390, 0.0
          %vm1399 = vcmp.gt.f32.partialorder %v1391, 0.0
          %vm1400 = vcmp.gt.f32.partialorder %v1392, 0.0
          %v1401 = vmul.f32 %v1385, 0.2
          %v1402 = vmul.f32 %v1386, 0.2
          %v1403 = vmul.f32 %v1387, 0.2
          %v1404 = vmul.f32 %v1388, 0.2
          %v1405 = vmul.f32 %v1389, 0.2
          %v1406 = vmul.f32 %v1390, 0.2
          %v1407 = vmul.f32 %v1391, 0.2
          %v1408 = vmul.f32 %v1392, 0.2
          %v1409 = vsel %vm1393, %v1385, %v1401
          %v1410 = vsel %vm1394, %v1386, %v1402
          %v1411 = vsel %vm1395, %v1387, %v1403
          %v1412 = vsel %vm1396, %v1388, %v1404
          %v1413 = vsel %vm1397, %v1389, %v1405
          %v1414 = vsel %vm1398, %v1390, %v1406
          %v1415 = vsel %vm1399, %v1391, %v1407
          %v1416 = vsel %vm1400, %v1392, %v1408
          %v1417 = vpack.c.bf16 %v1413, %v1409
          %v1418 = vpack.c.bf16 %v1414, %v1410
          %v1419 = vpack.c.bf16 %v1415, %v1411
          %v1420 = vpack.c.bf16 %v1416, %v1412
          %v1421 = vld [vmem:[%s3] sm:$0xff]
          %v1422 = vld [vmem:[%s3 + $0x8] sm:$0xff]
          %v1423 = vld [vmem:[%s3 + $0x10] sm:$0xff]
          %v1424 = vld [vmem:[%s3 + $0x18] sm:$0xff]
          %v1425 = vld [vmem:[%s3 + $0x20] sm:$0xff]
          %v1426 = vld [vmem:[%s3 + $0x28] sm:$0xff]
          %v1427 = vld [vmem:[%s3 + $0x30] sm:$0xff]
          %v1428 = vld [vmem:[%s3 + $0x38] sm:$0xff]
          %v1429 = vld [vmem:[%s3 + $0x40] sm:$0xff]
          %v1430 = vld [vmem:[%s3 + $0x48] sm:$0xff]
          %v1431 = vld [vmem:[%s3 + $0x50] sm:$0xff]
          %v1432 = vld [vmem:[%s3 + $0x58] sm:$0xff]
          %v1433 = vld [vmem:[%s3 + $0x60] sm:$0xff]
          %v1434 = vld [vmem:[%s3 + $0x68] sm:$0xff]
          %v1435 = vld [vmem:[%s3 + $0x70] sm:$0xff]
          %v1436 = vld [vmem:[%s3 + $0x78] sm:$0xff]
          %v1437 = vld [vmem:[%s3 + $0x80] sm:$0xff]
          %v1438 = vld [vmem:[%s3 + $0x88] sm:$0xff]
          %v1439 = vld [vmem:[%s3 + $0x90] sm:$0xff]
          %v1440 = vld [vmem:[%s3 + $0x98] sm:$0xff]
          %v1441 = vld [vmem:[%s3 + $0xa0] sm:$0xff]
          %v1442 = vld [vmem:[%s3 + $0xa8] sm:$0xff]
          %v1443 = vld [vmem:[%s3 + $0xb0] sm:$0xff]
          %v1444 = vld [vmem:[%s3 + $0xb8] sm:$0xff]
          %v1445 = vld [vmem:[%s3 + $0xc0] sm:$0xff]
          %v1446 = vld [vmem:[%s3 + $0xc8] sm:$0xff]
          %v1447 = vld [vmem:[%s3 + $0xd0] sm:$0xff]
          %v1448 = vld [vmem:[%s3 + $0xd8] sm:$0xff]
          %v1449 = vld [vmem:[%s3 + $0xe0] sm:$0xff]
          %v1450 = vld [vmem:[%s3 + $0xe8] sm:$0xff]
          %v1451 = vld [vmem:[%s3 + $0xf0] sm:$0xff]
          %v1452 = vld [vmem:[%s3 + $0xf8] sm:$0xff]
          %v1453 = vld [vmem:[%s3 + $0x100] sm:$0xff]
          %v1454 = vld [vmem:[%s3 + $0x108] sm:$0xff]
          %v1455 = vld [vmem:[%s3 + $0x110] sm:$0xff]
          %v1456 = vld [vmem:[%s3 + $0x118] sm:$0xff]
          %v1457 = vld [vmem:[%s3 + $0x120] sm:$0xff]
          %v1458 = vld [vmem:[%s3 + $0x128] sm:$0xff]
          %v1459 = vld [vmem:[%s3 + $0x130] sm:$0xff]
          %v1460 = vld [vmem:[%s3 + $0x138] sm:$0xff]
          %v1461 = vld [vmem:[%s3 + $0x140] sm:$0xff]
          %v1462 = vld [vmem:[%s3 + $0x148] sm:$0xff]
          %v1463 = vld [vmem:[%s3 + $0x150] sm:$0xff]
          %v1464 = vld [vmem:[%s3 + $0x158] sm:$0xff]
          %v1465 = vld [vmem:[%s3 + $0x160] sm:$0xff]
          %v1466 = vld [vmem:[%s3 + $0x168] sm:$0xff]
          %v1467 = vld [vmem:[%s3 + $0x170] sm:$0xff]
          %v1468 = vld [vmem:[%s3 + $0x178] sm:$0xff]
          %v1469 = vld [vmem:[%s3 + $0x180] sm:$0xff]
          %v1470 = vld [vmem:[%s3 + $0x188] sm:$0xff]
          %v1471 = vld [vmem:[%s3 + $0x190] sm:$0xff]
          %v1472 = vld [vmem:[%s3 + $0x198] sm:$0xff]
          %v1473 = vld [vmem:[%s3 + $0x1a0] sm:$0xff]
          %v1474 = vld [vmem:[%s3 + $0x1a8] sm:$0xff]
          %v1475 = vld [vmem:[%s3 + $0x1b0] sm:$0xff]
          %v1476 = vld [vmem:[%s3 + $0x1b8] sm:$0xff]
          %v1477 = vld [vmem:[%s3 + $0x1c0] sm:$0xff]
          %v1478 = vld [vmem:[%s3 + $0x1c8] sm:$0xff]
          %v1479 = vld [vmem:[%s3 + $0x1d0] sm:$0xff]
          %v1480 = vld [vmem:[%s3 + $0x1d8] sm:$0xff]
          %v1481 = vld [vmem:[%s3 + $0x1e0] sm:$0xff]
          %v1482 = vld [vmem:[%s3 + $0x1e8] sm:$0xff]
          %v1483 = vld [vmem:[%s3 + $0x1f0] sm:$0xff]
          %v1484 = vld [vmem:[%s3 + $0x1f8] sm:$0xff]
          %v1485 = vld [vmem:[%s4] sm:$0x3]
          %v1487 = vlaneseq
          %v1488 = vshrl.u32 %v1487, 7
          %v1489 = vsub.s32 0, %v1488
          %v1490 = vrot.slane %v1485, %v1489
          %v1491 = vlaneseq
          %v1492 = vshrl.u32 %v1491, 7
          %v1493 = vsub.s32 1, %v1492
          %v1494 = vrot.slane %v1485, %v1493
          %v1561 = vunpack.c.l.b16 %v1421
          %v1562 = vunpack.c.h.b16 %v1421
          %v1563 = vunpack.c.l.b16 %v1422
          %v1564 = vunpack.c.h.b16 %v1422
          %v1565 = vunpack.c.l.b16 %v1423
          %v1566 = vunpack.c.h.b16 %v1423
          %v1567 = vunpack.c.l.b16 %v1424
          %v1568 = vunpack.c.h.b16 %v1424
          %v1569 = vunpack.c.l.b16 %v1425
          %v1570 = vunpack.c.h.b16 %v1425
          %v1571 = vunpack.c.l.b16 %v1426
          %v1572 = vunpack.c.h.b16 %v1426
          %v1573 = vunpack.c.l.b16 %v1427
          %v1574 = vunpack.c.h.b16 %v1427
          %v1575 = vunpack.c.l.b16 %v1428
          %v1576 = vunpack.c.h.b16 %v1428
          %v1577 = vunpack.c.l.b16 %v1429
          %v1578 = vunpack.c.h.b16 %v1429
          %v1579 = vunpack.c.l.b16 %v1430
          %v1580 = vunpack.c.h.b16 %v1430
          %v1581 = vunpack.c.l.b16 %v1431
          %v1582 = vunpack.c.h.b16 %v1431
          %v1583 = vunpack.c.l.b16 %v1432
          %v1584 = vunpack.c.h.b16 %v1432
          %v1585 = vunpack.c.l.b16 %v1433
          %v1586 = vunpack.c.h.b16 %v1433
          %v1587 = vunpack.c.l.b16 %v1434
          %v1588 = vunpack.c.h.b16 %v1434
          %v1589 = vunpack.c.l.b16 %v1435
          %v1590 = vunpack.c.h.b16 %v1435
          %v1591 = vunpack.c.l.b16 %v1436
          %v1592 = vunpack.c.h.b16 %v1436
          %v1593 = vunpack.c.l.b16 %v1437
          %v1594 = vunpack.c.h.b16 %v1437
          %v1595 = vunpack.c.l.b16 %v1438
          %v1596 = vunpack.c.h.b16 %v1438
          %v1597 = vunpack.c.l.b16 %v1439
          %v1598 = vunpack.c.h.b16 %v1439
          %v1599 = vunpack.c.l.b16 %v1440
          %v1600 = vunpack.c.h.b16 %v1440
          %v1601 = vunpack.c.l.b16 %v1441
          %v1602 = vunpack.c.h.b16 %v1441
          %v1603 = vunpack.c.l.b16 %v1442
          %v1604 = vunpack.c.h.b16 %v1442
          %v1605 = vunpack.c.l.b16 %v1443
          %v1606 = vunpack.c.h.b16 %v1443
          %v1607 = vunpack.c.l.b16 %v1444
          %v1608 = vunpack.c.h.b16 %v1444
          %v1609 = vunpack.c.l.b16 %v1445
          %v1610 = vunpack.c.h.b16 %v1445
          %v1611 = vunpack.c.l.b16 %v1446
          %v1612 = vunpack.c.h.b16 %v1446
          %v1613 = vunpack.c.l.b16 %v1447
          %v1614 = vunpack.c.h.b16 %v1447
          %v1615 = vunpack.c.l.b16 %v1448
          %v1616 = vunpack.c.h.b16 %v1448
          %v1617 = vunpack.c.l.b16 %v1449
          %v1618 = vunpack.c.h.b16 %v1449
          %v1619 = vunpack.c.l.b16 %v1450
          %v1620 = vunpack.c.h.b16 %v1450
          %v1621 = vunpack.c.l.b16 %v1451
          %v1622 = vunpack.c.h.b16 %v1451
          %v1623 = vunpack.c.l.b16 %v1452
          %v1624 = vunpack.c.h.b16 %v1452
          %v1625 = vunpack.c.l.b16 %v1453
          %v1626 = vunpack.c.h.b16 %v1453
          %v1627 = vunpack.c.l.b16 %v1454
          %v1628 = vunpack.c.h.b16 %v1454
          %v1629 = vunpack.c.l.b16 %v1455
          %v1630 = vunpack.c.h.b16 %v1455
          %v1631 = vunpack.c.l.b16 %v1456
          %v1632 = vunpack.c.h.b16 %v1456
          %v1633 = vunpack.c.l.b16 %v1457
          %v1634 = vunpack.c.h.b16 %v1457
          %v1635 = vunpack.c.l.b16 %v1458
          %v1636 = vunpack.c.h.b16 %v1458
          %v1637 = vunpack.c.l.b16 %v1459
          %v1638 = vunpack.c.h.b16 %v1459
          %v1639 = vunpack.c.l.b16 %v1460
          %v1640 = vunpack.c.h.b16 %v1460
          %v1641 = vunpack.c.l.b16 %v1461
          %v1642 = vunpack.c.h.b16 %v1461
          %v1643 = vunpack.c.l.b16 %v1462
          %v1644 = vunpack.c.h.b16 %v1462
          %v1645 = vunpack.c.l.b16 %v1463
          %v1646 = vunpack.c.h.b16 %v1463
          %v1647 = vunpack.c.l.b16 %v1464
          %v1648 = vunpack.c.h.b16 %v1464
          %v1649 = vunpack.c.l.b16 %v1465
          %v1650 = vunpack.c.h.b16 %v1465
          %v1651 = vunpack.c.l.b16 %v1466
          %v1652 = vunpack.c.h.b16 %v1466
          %v1653 = vunpack.c.l.b16 %v1467
          %v1654 = vunpack.c.h.b16 %v1467
          %v1655 = vunpack.c.l.b16 %v1468
          %v1656 = vunpack.c.h.b16 %v1468
          %v1657 = vunpack.c.l.b16 %v1469
          %v1658 = vunpack.c.h.b16 %v1469
          %v1659 = vunpack.c.l.b16 %v1470
          %v1660 = vunpack.c.h.b16 %v1470
          %v1661 = vunpack.c.l.b16 %v1471
          %v1662 = vunpack.c.h.b16 %v1471
          %v1663 = vunpack.c.l.b16 %v1472
          %v1664 = vunpack.c.h.b16 %v1472
          %v1665 = vunpack.c.l.b16 %v1473
          %v1666 = vunpack.c.h.b16 %v1473
          %v1667 = vunpack.c.l.b16 %v1474
          %v1668 = vunpack.c.h.b16 %v1474
          %v1669 = vunpack.c.l.b16 %v1475
          %v1670 = vunpack.c.h.b16 %v1475
          %v1671 = vunpack.c.l.b16 %v1476
          %v1672 = vunpack.c.h.b16 %v1476
          %v1673 = vunpack.c.l.b16 %v1477
          %v1674 = vunpack.c.h.b16 %v1477
          %v1675 = vunpack.c.l.b16 %v1478
          %v1676 = vunpack.c.h.b16 %v1478
          %v1677 = vunpack.c.l.b16 %v1479
          %v1678 = vunpack.c.h.b16 %v1479
          %v1679 = vunpack.c.l.b16 %v1480
          %v1680 = vunpack.c.h.b16 %v1480
          %v1681 = vunpack.c.l.b16 %v1481
          %v1682 = vunpack.c.h.b16 %v1481
          %v1683 = vunpack.c.l.b16 %v1482
          %v1684 = vunpack.c.h.b16 %v1482
          %v1685 = vunpack.c.l.b16 %v1483
          %v1686 = vunpack.c.h.b16 %v1483
          %v1687 = vunpack.c.l.b16 %v1484
          %v1688 = vunpack.c.h.b16 %v1484
          %v1689 = vpack.c.b16 %v1563, %v1561
          %v1690 = vpack.c.b16 %v1564, %v1562
          %v1691 = vpack.c.b16 %v1567, %v1565
          %v1692 = vpack.c.b16 %v1568, %v1566
          %v1693 = vpack.c.b16 %v1571, %v1569
          %v1694 = vpack.c.b16 %v1572, %v1570
          %v1695 = vpack.c.b16 %v1575, %v1573
          %v1696 = vpack.c.b16 %v1576, %v1574
          %v1697 = vpack.c.b16 %v1579, %v1577
          %v1698 = vpack.c.b16 %v1580, %v1578
          %v1699 = vpack.c.b16 %v1583, %v1581
          %v1700 = vpack.c.b16 %v1584, %v1582
          %v1701 = vpack.c.b16 %v1587, %v1585
          %v1702 = vpack.c.b16 %v1588, %v1586
          %v1703 = vpack.c.b16 %v1591, %v1589
          %v1704 = vpack.c.b16 %v1592, %v1590
          %v1705 = vpack.c.b16 %v1595, %v1593
          %v1706 = vpack.c.b16 %v1596, %v1594
          %v1707 = vpack.c.b16 %v1599, %v1597
          %v1708 = vpack.c.b16 %v1600, %v1598
          %v1709 = vpack.c.b16 %v1603, %v1601
          %v1710 = vpack.c.b16 %v1604, %v1602
          %v1711 = vpack.c.b16 %v1607, %v1605
          %v1712 = vpack.c.b16 %v1608, %v1606
          %v1713 = vpack.c.b16 %v1611, %v1609
          %v1714 = vpack.c.b16 %v1612, %v1610
          %v1715 = vpack.c.b16 %v1615, %v1613
          %v1716 = vpack.c.b16 %v1616, %v1614
          %v1717 = vpack.c.b16 %v1619, %v1617
          %v1718 = vpack.c.b16 %v1620, %v1618
          %v1719 = vpack.c.b16 %v1623, %v1621
          %v1720 = vpack.c.b16 %v1624, %v1622
          %v1721 = vpack.c.b16 %v1627, %v1625
          %v1722 = vpack.c.b16 %v1628, %v1626
          %v1723 = vpack.c.b16 %v1631, %v1629
          %v1724 = vpack.c.b16 %v1632, %v1630
          %v1725 = vpack.c.b16 %v1635, %v1633
          %v1726 = vpack.c.b16 %v1636, %v1634
          %v1727 = vpack.c.b16 %v1639, %v1637
          %v1728 = vpack.c.b16 %v1640, %v1638
          %v1729 = vpack.c.b16 %v1643, %v1641
          %v1730 = vpack.c.b16 %v1644, %v1642
          %v1731 = vpack.c.b16 %v1647, %v1645
          %v1732 = vpack.c.b16 %v1648, %v1646
          %v1733 = vpack.c.b16 %v1651, %v1649
          %v1734 = vpack.c.b16 %v1652, %v1650
          %v1735 = vpack.c.b16 %v1655, %v1653
          %v1736 = vpack.c.b16 %v1656, %v1654
          %v1737 = vpack.c.b16 %v1659, %v1657
          %v1738 = vpack.c.b16 %v1660, %v1658
          %v1739 = vpack.c.b16 %v1663, %v1661
          %v1740 = vpack.c.b16 %v1664, %v1662
          %v1741 = vpack.c.b16 %v1667, %v1665
          %v1742 = vpack.c.b16 %v1668, %v1666
          %v1743 = vpack.c.b16 %v1671, %v1669
          %v1744 = vpack.c.b16 %v1672, %v1670
          %v1745 = vpack.c.b16 %v1675, %v1673
          %v1746 = vpack.c.b16 %v1676, %v1674
          %v1747 = vpack.c.b16 %v1679, %v1677
          %v1748 = vpack.c.b16 %v1680, %v1678
          %v1749 = vpack.c.b16 %v1683, %v1681
          %v1750 = vpack.c.b16 %v1684, %v1682
          %v1751 = vpack.c.b16 %v1687, %v1685
          %v1752 = vpack.c.b16 %v1688, %v1686
          %1817 = vmatprep.subr.bf16.mxu0 %v1704
          %1818 = vmatpush1.bf16.msra.mxu0 %v1703
          %1819 = vmatprep.subr.bf16.mxu0 %v1702
          %1820 = vmatpush1.bf16.msra.mxu0 %v1701
          %1821 = vmatprep.subr.bf16.mxu0 %v1700
          %1822 = vmatpush1.bf16.msra.mxu0 %v1699
          %1823 = vmatprep.subr.bf16.mxu0 %v1698
          %1824 = vmatpush1.bf16.msra.mxu0 %v1697
          %1825 = vmatprep.subr.bf16.mxu0 %v1696
          %1826 = vmatpush1.bf16.msra.mxu0 %v1695
          %1827 = vmatprep.subr.bf16.mxu0 %v1694
          %1828 = vmatpush1.bf16.msra.mxu0 %v1693
          %1829 = vmatprep.subr.bf16.mxu0 %v1692
          %1830 = vmatpush1.bf16.msra.mxu0 %v1691
          %1831 = vmatprep.subr.bf16.mxu0 %v1690
          %1832 = vmatpush1.bf16.msra.mxu0 %v1689
          %1833 = vmatprep.subr.bf16.mxu0 %v1720
          %1834 = vmatpush2.bf16.msra.mxu0 %v1719
          %1835 = vmatprep.subr.bf16.mxu0 %v1718
          %1836 = vmatpush2.bf16.msra.mxu0 %v1717
          %1837 = vmatprep.subr.bf16.mxu0 %v1716
          %1838 = vmatpush2.bf16.msra.mxu0 %v1715
          %1839 = vmatprep.subr.bf16.mxu0 %v1714
          %1840 = vmatpush2.bf16.msra.mxu0 %v1713
          %1841 = vmatprep.subr.bf16.mxu0 %v1712
          %1842 = vmatpush2.bf16.msra.mxu0 %v1711
          %1843 = vmatprep.subr.bf16.mxu0 %v1710
          %1844 = vmatpush2.bf16.msra.mxu0 %v1709
          %1845 = vmatprep.subr.bf16.mxu0 %v1708
          %1846 = vmatpush2.bf16.msra.mxu0 %v1707
          %1847 = vmatprep.subr.bf16.mxu0 %v1706
          %1848 = vmatpush2.bf16.msra.mxu0 %v1705
          %1849 = vmatprep.mubr.bf16.mxu0 %v1418
          %1850 = vmatmul.mubr.bf16.gmra.mxu0 %v1417
          %v1851 = vpop.f32.mrf.mxu0
          %v1852 = vadd.f32 %v1490, %v1851
          %v1853 = vpop.f32.mrf.mxu0
          %v1854 = vadd.f32 %v1494, %v1853
          %v1855 = vpop.f32.mrf.mxu0
          %v1856 = vadd.f32 %v1490, %v1855
          %v1857 = vpop.f32.mrf.mxu0
          %v1858 = vadd.f32 %v1494, %v1857
          %1859 = vdwg.mxu0
          %1860 = vmatprep.subr.bf16.mxu0 %v1736
          %1861 = vmatpush1.bf16.msra.mxu0 %v1735
          %1862 = vmatprep.subr.bf16.mxu0 %v1734
          %1863 = vmatpush1.bf16.msra.mxu0 %v1733
          %1864 = vmatprep.subr.bf16.mxu0 %v1732
          %1865 = vmatpush1.bf16.msra.mxu0 %v1731
          %1866 = vmatprep.subr.bf16.mxu0 %v1730
          %1867 = vmatpush1.bf16.msra.mxu0 %v1729
          %1868 = vmatprep.subr.bf16.mxu0 %v1728
          %1869 = vmatpush1.bf16.msra.mxu0 %v1727
          %1870 = vmatprep.subr.bf16.mxu0 %v1726
          %1871 = vmatpush1.bf16.msra.mxu0 %v1725
          %1872 = vmatprep.subr.bf16.mxu0 %v1724
          %1873 = vmatpush1.bf16.msra.mxu0 %v1723
          %1874 = vmatprep.subr.bf16.mxu0 %v1722
          %1875 = vmatpush1.bf16.msra.mxu0 %v1721
          %1876 = vmatprep.subr.bf16.mxu0 %v1752
          %1877 = vmatpush2.bf16.msra.mxu0 %v1751
          %1878 = vmatprep.subr.bf16.mxu0 %v1750
          %1879 = vmatpush2.bf16.msra.mxu0 %v1749
          %1880 = vmatprep.subr.bf16.mxu0 %v1748
          %1881 = vmatpush2.bf16.msra.mxu0 %v1747
          %1882 = vmatprep.subr.bf16.mxu0 %v1746
          %1883 = vmatpush2.bf16.msra.mxu0 %v1745
          %1884 = vmatprep.subr.bf16.mxu0 %v1744
          %1885 = vmatpush2.bf16.msra.mxu0 %v1743
          %1886 = vmatprep.subr.bf16.mxu0 %v1742
          %1887 = vmatpush2.bf16.msra.mxu0 %v1741
          %1888 = vmatprep.subr.bf16.mxu0 %v1740
          %1889 = vmatpush2.bf16.msra.mxu0 %v1739
          %1890 = vmatprep.subr.bf16.mxu0 %v1738
          %1891 = vmatpush2.bf16.msra.mxu0 %v1737
          %1892 = vmatprep.mubr.bf16.mxu0 %v1420
          %1893 = vmatmul.mubr.bf16.gmra.mxu0 %v1419
          %v1894 = vpop.f32.mrf.mxu0
          %v1895 = vadd.f32 %v1852, %v1894
          %v1896 = vpop.f32.mrf.mxu0
          %v1897 = vadd.f32 %v1854, %v1896
          %v1898 = vpop.f32.mrf.mxu0
          %v1899 = vadd.f32 %v1856, %v1898
          %v1900 = vpop.f32.mrf.mxu0
          %v1901 = vadd.f32 %v1858, %v1900
          %1902 = vdwg.mxu0
          %vm1903 = vcmp.gt.f32.partialorder %v1895, 0.0
          %vm1904 = vcmp.gt.f32.partialorder %v1897, 0.0
          %vm1905 = vcmp.gt.f32.partialorder %v1899, 0.0
          %vm1906 = vcmp.gt.f32.partialorder %v1901, 0.0
          %v1907 = vmul.f32 %v1895, 0.2
          %v1908 = vmul.f32 %v1897, 0.2
          %v1909 = vmul.f32 %v1899, 0.2
          %v1910 = vmul.f32 %v1901, 0.2
          %v1911 = vsel %vm1903, %v1895, %v1907
          %v1912 = vsel %vm1904, %v1897, %v1908
          %v1913 = vsel %vm1905, %v1899, %v1909
          %v1914 = vsel %vm1906, %v1901, %v1910
          %v1915 = vld [vmem:[%s5] sm:$0x3]
          %v1917 = vlaneseq
          %v1918 = vshrl.u32 %v1917, 7
          %v1919 = vsub.s32 0, %v1918
          %v1920 = vrot.slane %v1915, %v1919
          %v1921 = vlaneseq
          %v1922 = vshrl.u32 %v1921, 7
          %v1923 = vsub.s32 1, %v1922
          %v1924 = vrot.slane %v1915, %v1923
          %v1927 = vmul.f32 %v1911, %v1920
          %v1928 = vmul.f32 %v1912, %v1924
          %v1929 = vmul.f32 %v1913, %v1920
          %v1930 = vmul.f32 %v1914, %v1924
          %v1931 = vadd.f32 %v1927, %v1928
          %1932 = vadd.xlane.f32.xlu0 %v1931
          %v1933 = vpop.xlane.xlu0 %1932
          %v1934 = vadd.f32 %v1929, %v1930
          %1935 = vadd.xlane.f32.xlu0 %v1934
          %v1936 = vpop.xlane.xlu0 %1935
          %s1937 = sld [smem:[#allocation3]]
          %v1938 = vstv %s1937
          %v1939 = vadd.f32 %v1933, %v1938
          %v1940 = vadd.f32 %v1936, %v1938
          %v1941 = vsub.f32 0.0, %v1939
          %v1942 = vsub.f32 0.0, %v1940
          %v1943 = vmul.f32 %v1941, 1.442695
          %v1944 = vpow.pop %v1943
          %v1945 = vmul.f32 %v1942, 1.442695
          %v1946 = vpow.pop %v1945
          %v1947 = vadd.f32 %v1944, 1.0
          %v1948 = vadd.f32 %v1946, 1.0
          %v1949 = vrcp.pop %v1947
          %v1950 = vrcp.pop %v1948
          %vm1951 = vcmask 7168
          %1952 = vst.msk [vmem:[%s349] sm:$0xff] %vm1951, %v1949
          %1953 = vst.msk [vmem:[%s349 + $0x8] sm:$0xff] %vm1951, %v1950
        $region79: #{discriminator_forward.1} parent=66 // pred_fallthru
          _
        %s1954 = smul.u32 2, %s23
        %p1955 = scmp.lt.s32.totalorder %s1954, 1
        %s1956 = scalar_select %p1955, %s1954, 1
        %s1957 = smul.addr %s1956, 8
        %s1958 = scalar_lea.vmem %s7, %s1957
        // Predicated region
        $region80: #{discriminator_forward.1} parent=66 // pred_check
          %p1959 = pneg %p208
        $region81: #{discriminator_forward.1} parent=66 // pred_check_branch
          %1961 = sbr.rel (%p1959) target = $region83
        $region82: #{discriminator_forward.1} parent=66 // pred_region
          %s1962 = smul.u32 2, %s23
        $region83: #{discriminator_forward.1} parent=66 // pred_fallthru
          _
        // Predicated region
        $region84: #{discriminator_forward.1} parent=66 // pred_check
          %p1963 = pneg %p208
        $region85: #{discriminator_forward.1} parent=66 // pred_check_branch
          %1965 = sbr.rel (%p1963) target = $region87
        $region86: #{discriminator_forward.1} parent=66 // pred_region
          %s1966 = smul.u32 2, %s23
          %p1967 = scmp.lt.s32.totalorder %s1966, 1
          %s1968 = scalar_select %p1967, %s1966, 1
          %s1969 = smul.addr %s1968, 8
          %s1970 = scalar_lea.vmem %s7, %s1969
        $region87: #{discriminator_forward.1} parent=66 // pred_fallthru
          _
      $region67: #{discriminator_forward.1} parent=5 // pred_fallthru
        _
      %p1971 = scmp.le.s32.totalorder 2, %s14
      // Predicated region
      $region88: #{discriminator_forward.1} parent=5 // pred_check
        %p1972 = pneg %p1971
      $region89: #{discriminator_forward.1} parent=5 // pred_check_branch
        %1974 = sbr.rel (%p1972) target = $region91
      $region90: #{discriminator_forward.1} parent=5 // pred_region
        %s1975 = ssub.s32 %s14, 2
      $region91: #{discriminator_forward.1} parent=5 // pred_fallthru
        _
    $region6: #{discriminator_forward.1} parent=1 // loop_footer
      %s18 = sadd.s32 1, %s14
    $region7: #{discriminator_forward.1} parent=1 // loop_footer_branch
      %13 = sbr.rel target = $region3
    $region8: #{discriminator_forward.1} parent=1 // loop_exit
      _

</llo_original>
